<compile_context>
chip_gen: v7x
topology: tpu7x:2x2x1
jax: 0.10.0
libtpu: 0.0.40
codegen_flags: <defaults>
</compile_context>

<pallas_src>
import math

import jax
import jax.numpy as jnp
import numpy as np
from jax.experimental import pallas as pl
from jax.experimental.pallas import tpu as pltpu  # noqa: F401  (TPU-specific params if needed)

# ----------------------------- model dimensions ------------------------------
EMBED = 32
HEADS = 8
HEAD_DIM = EMBED // HEADS
EXPANSION = 4
SEQ = 8
BATCH = 2
BS = BATCH * SEQ          # 16  flattened activation rows
HBS = HEADS * BS          # 128 rows of per-(head, batch, seq) attention scores
EPS = 1e-5                # nn.LayerNorm default
NEG_INF = -1e20           # torch masked_fill value

# column layout of the packed constant array (width 3E + 2*BS = 96)
_C_HEADMASK = 0                      # cols [ 0, 32)  head-selection mask  (HBS, E)
_C_BIAS_SELF = EMBED                 # cols [32, 48)  self-attn additive bias (HBS, BS)
_C_BIAS_CROSS = EMBED + BS           # cols [48, 64)  cross-attn additive bias (HBS, BS)
_C_VECS = EMBED + 2 * BS             # cols [64, 96)  packed vectors, rows 0..8


# ----------------------------- in-kernel helpers ------------------------------
def _layernorm(x, g, b):
    mean = jnp.mean(x, axis=-1, keepdims=True)
    var = jnp.mean((x - mean) ** 2, axis=-1, keepdims=True)
    return (x - mean) * jax.lax.rsqrt(var + EPS) * g + b


# ----------------------------------- kernel -----------------------------------
def decoder_layer_kernel(
    xqk_ref,     # (B*S, 3E)  [x | query | key]
    w_in_ref,    # (3E, 5E)   block-diag fused projection -> [sQ | sK | sV | cQ | cK]
    w_mats_ref,  # (3, E, E)  [self out-proj, cross out-proj, cross V-proj]
    w_ff1_ref,   # (E, 4E)
    b_ff1_ref,   # (1, 4E)
    w_ff2_ref,   # (4E, E)
    const_ref,   # (HBS, 96)  head mask | self bias | cross bias | packed vectors
    out_ref,     # (B*S, E)
):
    f32 = jnp.float32
    E = EMBED

    # -------- packed constants (single DMA'd array, static slices) --------
    head_mask = const_ref[:, _C_HEADMASK:_C_HEADMASK + E]        # (128, 32)
    bias_self = const_ref[:, _C_BIAS_SELF:_C_BIAS_SELF + BS]     # (128, 16)
    bias_cross = const_ref[:, _C_BIAS_CROSS:_C_BIAS_CROSS + BS]  # (128, 16)
    vb = const_ref[0:16, _C_VECS:_C_VECS + E]                    # (16, 32), rows 0..8 used
    s_bo, c_bo = vb[0:1], vb[1:2]
    n_g, n_b = vb[2:3], vb[3:4]
    n1_g, n1_b = vb[4:5], vb[5:6]
    n2_g, n2_b = vb[6:7], vb[7:8]
    ff_b2 = vb[8:9]

    xqk = xqk_ref[...]                                           # (16, 96)
    x = xqk[:, 0:E]                                              # residual input

    # -------- ONE fused block-diag input projection (K=96, N=160) --------
    proj = jnp.dot(xqk, w_in_ref[...], preferred_element_type=f32)   # (16, 160)
    q_s, k_s, v_s = proj[:, 0:E], proj[:, E:2 * E], proj[:, 2 * E:3 * E]
    q_c, k_c = proj[:, 3 * E:4 * E], proj[:, 4 * E:5 * E]

    def attention(q, k, v, bias, w_o, b_o):
        """All heads AND both batch elements in one scores matmul + one PV matmul.

        q, k, v: (B*S, E); bias: (H*B*S, B*S) additive (-1e20 on masked / cross-batch).
        Row ordering of the expanded problem is (head, batch, seq).
        """
        q_exp = jnp.tile(q, (HEADS, 1)) * head_mask                           # (128, 32)
        scores = jax.lax.dot_general(q_exp, k, (((1,), (1,)), ((), ())),
                                     preferred_element_type=f32) + bias       # (128, 16)
        m = jnp.max(scores, axis=-1, keepdims=True)
        e = jnp.exp(scores - m)
        p = e * pl.reciprocal(jnp.sum(e, axis=-1, keepdims=True), approx=True)
        pv = jnp.dot(p, v, preferred_element_type=f32) * head_mask            # (128, 32)
        # Fold head blocks back to (B*S, E): depth-3 tree of sublane-aligned slice adds.
        blocks = [pv[h * BS:(h + 1) * BS, :] for h in range(HEADS)]
        while len(blocks) > 1:
            blocks = [blocks[i] + blocks[i + 1] for i in range(0, len(blocks), 2)]
        concat = blocks[0]                                                    # (16, 32)
        return jnp.dot(concat, w_o, preferred_element_type=f32) + b_o

    # ---- DecoderLayer: masked self-attention + add & norm (dropout = identity) ----
    attn = attention(q_s, k_s, v_s, bias_self, w_mats_ref[0], s_bo)
    value = _layernorm(attn + x, n_g, n_b)

    # ---- TransformerBlock cross-attention: q <- query, k <- key, v <- value ----
    v_c = jnp.dot(value, w_mats_ref[2], preferred_element_type=f32)
    attn2 = attention(q_c, k_c, v_c, bias_cross, w_mats_ref[1], c_bo)
    n1 = _layernorm(attn2 + value, n1_g, n1_b)

    # ---- feed-forward: Linear -> ReLU -> Linear, then add & norm ----
    h = jnp.maximum(
        jnp.dot(n1, w_ff1_ref[...], preferred_element_type=f32) + b_ff1_ref[...], 0.0)
    ff = jnp.dot(h, w_ff2_ref[...], preferred_element_type=f32) + ff_b2
    out_ref[...] = _layernorm(ff + n1, n2_g, n2_b)


# ---------------------------------- wrapper ------------------------------------
def decoder_layer_pallas(x, key, query, mask, kp):
    B, S, E = x.shape
    # Fused input activation: [x | query | key] -> one projection matmul in-kernel.
    xqk = jnp.concatenate(
        [x.reshape(B * S, E), query.reshape(B * S, E), key.reshape(B * S, E)], axis=1)

    # Additive self-attention bias built in the wrapper (XLA side): user/causal mask
    # combined with the same-batch constraint, tiled over heads (row order (h, b, s)).
    m2 = mask.reshape(B, S, S).astype(jnp.float32)
    allow = jnp.zeros((B * S, B * S), jnp.float32)
    for b in range(B):
        allow = allow.at[b * S:(b + 1) * S, b * S:(b + 1) * S].set(m2[b])
    bias_self = jnp.tile(
        jnp.where(allow > 0, 0.0, NEG_INF).astype(jnp.float32), (HEADS, 1))

    # One packed constant array: head mask | self bias | cross bias | packed vectors.
    const = jnp.concatenate(
        [kp["head_mask"], bias_self, kp["bias_cross"], kp["vec_block"]], axis=1)

    # Single kernel invocation, no grid: total resident data is <100 KB, far below the
    # VMEM budget on every generation (incl. v7x's 64 MiB). If B or S ever scale, add a
    # leading batch grid axis with dimension_semantics=("parallel",) to use v7x's 2nd TC.
    out = pl.pallas_call(
        decoder_layer_kernel,
        out_shape=jax.ShapeDtypeStruct((B * S, E), jnp.float32),
    )(xqk, kp["w_in"], kp["w_mats"], kp["w_ff1"], kp["b_ff1"], kp["w_ff2"], const)
    return out.reshape(B, S, E)


# ------------------------- parameters (deterministic) ---------------------------
def make_torch_style_params(rng):
    """Parameters with the same shapes nn.Module.__init__ would create."""
    ks = jax.random.split(rng, 14)
    d, E = HEAD_DIM, EMBED

    def w(k, shape, scale=0.1):
        return (jax.random.normal(k, shape, jnp.float32) * scale).astype(jnp.float32)

    return {
        # self-attention (MultiHeadAttention): Linear(d, d, bias=False) x3, Linear(E, E)
        "s_wq": w(ks[0], (d, d)), "s_wk": w(ks[1], (d, d)), "s_wv": w(ks[2], (d, d)),
        "s_wo": w(ks[3], (E, E)), "s_bo": w(ks[4], (E,)),
        # DecoderLayer.norm (default init: gamma=1, beta=0)
        "n_g": jnp.ones((E,), jnp.float32), "n_b": jnp.zeros((E,), jnp.float32),
        # transformer-block cross-attention
        "c_wq": w(ks[5], (d, d)), "c_wk": w(ks[6], (d, d)), "c_wv": w(ks[7], (d, d)),
        "c_wo": w(ks[8], (E, E)), "c_bo": w(ks[9], (E,)),
        # transformer-block norms
        "n1_g": jnp.ones((E,), jnp.float32), "n1_b": jnp.zeros((E,), jnp.float32),
        "n2_g": jnp.ones((E,), jnp.float32), "n2_b": jnp.zeros((E,), jnp.float32),
        # feed-forward: Linear(E, 4E), Linear(4E, E)  (torch weight shape = (out, in))
        "w1": w(ks[10], (EXPANSION * E, E)), "b1": w(ks[11], (EXPANSION * E,)),
        "w2": w(ks[12], (E, EXPANSION * E)), "b2": w(ks[13], (E,)),
    }


def to_kernel_params(p):
    """Pack torch-shaped params into a few fused right-multiply tensors."""
    f32 = jnp.float32
    E, d, H = EMBED, HEAD_DIM, HEADS
    eye_h = jnp.eye(H, dtype=f32)

    def blockdiag(w_dd):  # per-head Linear(d, d, bias=False) as an (E, E) right-multiply
        return jnp.kron(eye_h, w_dd.T)

    scale = 1.0 / math.sqrt(d)  # folded into the Q projections (free, offline)

    # Fused input projection: [x | query | key] (B*S, 3E) @ w_in (3E, 5E)
    #   -> [self Q | self K | self V | cross Q | cross K]
    w_in = jnp.zeros((3 * E, 5 * E), f32)
    w_in = w_in.at[0:E, 0:E].set(blockdiag(p["s_wq"]) * scale)
    w_in = w_in.at[0:E, E:2 * E].set(blockdiag(p["s_wk"]))
    w_in = w_in.at[0:E, 2 * E:3 * E].set(blockdiag(p["s_wv"]))
    w_in = w_in.at[E:2 * E, 3 * E:4 * E].set(blockdiag(p["c_wq"]) * scale)
    w_in = w_in.at[2 * E:3 * E, 4 * E:5 * E].set(blockdiag(p["c_wk"]))

    # Output projections + cross-attention V projection, stacked.
    w_mats = jnp.stack([p["s_wo"].T, p["c_wo"].T, blockdiag(p["c_wv"])], axis=0)

    # Packed per-feature vectors (rows 0..8 of a (HBS, E) block).
    vecs = jnp.stack([p["s_bo"], p["c_bo"], p["n_g"], p["n_b"],
                      p["n1_g"], p["n1_b"], p["n2_g"], p["n2_b"], p["b2"]], axis=0)
    vec_block = jnp.zeros((HBS, E), f32).at[0:9, :].set(vecs)

    # Static head-selection mask: row (h, b, s) keeps only head h's feature columns.
    rows = np.arange(HBS)[:, None] // BS
    cols = np.arange(E)[None, :] // HEAD_DIM
    head_mask = jnp.asarray((rows == cols).astype(np.float32))

    # Static cross-attention bias: only same-batch positions are attendable.
    same_batch = np.kron(np.eye(BATCH), np.ones((SEQ, SEQ)))
    bias_cross = jnp.asarray(
        np.tile(np.where(same_batch > 0, 0.0, NEG_INF), (HEADS, 1)).astype(np.float32))

    return {
        "w_in": w_in,                      # (96, 160)
        "w_mats": w_mats,                  # (3, 32, 32)
        "w_ff1": p["w1"].T,                # (32, 128)
        "b_ff1": p["b1"].reshape(1, -1),   # (1, 128)
        "w_ff2": p["w2"].T,                # (128, 32)
        "head_mask": head_mask,            # (128, 32)
        "bias_cross": bias_cross,          # (128, 16)
        "vec_block": vec_block,            # (128, 32)
    }


# --------------------- pure-JAX reference (torch semantics) ---------------------
def _ln_ref(x, g, b):
    mean = jnp.mean(x, axis=-1, keepdims=True)
    var = jnp.mean((x - mean) ** 2, axis=-1, keepdims=True)
    return (x - mean) / jnp.sqrt(var + EPS) * g + b


def _mha_ref(key, query, value, wq, wk, wv, wo, bo, mask=None):
    B, Sk, E = key.shape
    Sq = query.shape[1]
    kv = key.reshape(B, Sk, HEADS, HEAD_DIM)
    qv = query.reshape(B, Sq, HEADS, HEAD_DIM)
    vv = value.reshape(B, Sk, HEADS, HEAD_DIM)
    k = kv @ wk.T
    q = qv @ wq.T
    v = vv @ wv.T
    q, k, v = (t.transpose(0, 2, 1, 3) for t in (q, k, v))  # (B, H, S, d)
    prod = q @ jnp.swapaxes(k, -1, -2)                      # (B, H, Sq, Sk)
    if mask is not None:
        prod = jnp.where(mask == 0, NEG_INF, prod)
    prod = prod / math.sqrt(HEAD_DIM)
    scores = jax.nn.softmax(prod, axis=-1)
    out = scores @ v                                        # (B, H, Sq, d)
    concat = out.transpose(0, 2, 1, 3).reshape(B, Sq, E)
    return concat @ wo.T + bo


def decoder_layer_ref(x, key, query, mask, p):
    attn = _mha_ref(x, x, x, p["s_wq"], p["s_wk"], p["s_wv"], p["s_wo"], p["s_bo"], mask)
    value = _ln_ref(attn + x, p["n_g"], p["n_b"])
    attn2 = _mha_ref(key, query, value,
                     p["c_wq"], p["c_wk"], p["c_wv"], p["c_wo"], p["c_bo"], None)
    n1 = _ln_ref(attn2 + value, p["n1_g"], p["n1_b"])
    ff = jnp.maximum(n1 @ p["w1"].T + p["b1"], 0.0) @ p["w2"].T + p["b2"]
    return _ln_ref(ff + n1, p["n2_g"], p["n2_b"])


# ------------------------------------- main -------------------------------------
if __name__ == "__main__":
    root = jax.random.PRNGKey(0)
    k_x, k_k, k_q, k_p = jax.random.split(root, 4)

    x = jax.random.normal(k_x, (BATCH, SEQ, EMBED), jnp.float32)
    key_in = jax.random.normal(k_k, (BATCH, SEQ, EMBED), jnp.float32)
    query_in = jax.random.normal(k_q, (BATCH, SEQ, EMBED), jnp.float32)
    # causal target mask, shape (B, 1, S, S), 1 = attend, 0 = masked
    mask = jnp.tril(jnp.ones((SEQ, SEQ), jnp.float32))[None, None].repeat(BATCH, axis=0)

    params = make_torch_style_params(k_p)
    kparams = to_kernel_params(params)

    out = decoder_layer_pallas(x, key_in, query_in, mask, kparams)
    out = jax.block_until_ready(out)

    ref = decoder_layer_ref(x, key_in, query_in, mask, params)
    np.testing.assert_allclose(np.asarray(out), np.asarray(ref), rtol=1e-3, atol=1e-3)

    print("KERNEL_OK")
</pallas_src>

<mosaic_0001>
module attributes {stable_mosaic.version = 11 : i64} {
  func.func @decoder_layer_kernel(%arg0: memref<16x96xf32, #tpu.memory_space<vmem>>, %arg1: memref<96x160xf32, #tpu.memory_space<vmem>>, %arg2: memref<3x32x32xf32, #tpu.memory_space<vmem>>, %arg3: memref<32x128xf32, #tpu.memory_space<vmem>>, %arg4: memref<1x128xf32, #tpu.memory_space<vmem>>, %arg5: memref<128x32xf32, #tpu.memory_space<vmem>>, %arg6: memref<128x96xf32, #tpu.memory_space<vmem>>, %arg7: memref<16x32xf32, #tpu.memory_space<vmem>>) attributes {dimension_semantics = [], scalar_prefetch = 0 : i64, scratch_operands = 0 : i64, tpu.core_type = #tpu.core_type<tc>} {
    %c0 = arith.constant 0 : index
    %c0_0 = arith.constant 0 : index
    %0 = vector.load %arg6[%c0, %c0_0] : memref<128x96xf32, #tpu.memory_space<vmem>>, vector<128x32xf32>
    %c0_1 = arith.constant 0 : index
    %c32 = arith.constant 32 : index
    %1 = vector.load %arg6[%c0_1, %c32] : memref<128x96xf32, #tpu.memory_space<vmem>>, vector<128x16xf32>
    %c0_2 = arith.constant 0 : index
    %c48 = arith.constant 48 : index
    %2 = vector.load %arg6[%c0_2, %c48] : memref<128x96xf32, #tpu.memory_space<vmem>>, vector<128x16xf32>
    %c0_3 = arith.constant 0 : index
    %c64 = arith.constant 64 : index
    %3 = vector.load %arg6[%c0_3, %c64] : memref<128x96xf32, #tpu.memory_space<vmem>>, vector<16x32xf32>
    %4 = vector.extract_strided_slice %3 {offsets = [0, 0], sizes = [1, 32], strides = [1, 1]} : vector<16x32xf32> to vector<1x32xf32>
    %5 = vector.extract_strided_slice %3 {offsets = [1, 0], sizes = [1, 32], strides = [1, 1]} : vector<16x32xf32> to vector<1x32xf32>
    %6 = vector.extract_strided_slice %3 {offsets = [2, 0], sizes = [1, 32], strides = [1, 1]} : vector<16x32xf32> to vector<1x32xf32>
    %7 = vector.extract_strided_slice %3 {offsets = [3, 0], sizes = [1, 32], strides = [1, 1]} : vector<16x32xf32> to vector<1x32xf32>
    %8 = vector.extract_strided_slice %3 {offsets = [4, 0], sizes = [1, 32], strides = [1, 1]} : vector<16x32xf32> to vector<1x32xf32>
    %9 = vector.extract_strided_slice %3 {offsets = [5, 0], sizes = [1, 32], strides = [1, 1]} : vector<16x32xf32> to vector<1x32xf32>
    %10 = vector.extract_strided_slice %3 {offsets = [6, 0], sizes = [1, 32], strides = [1, 1]} : vector<16x32xf32> to vector<1x32xf32>
    %11 = vector.extract_strided_slice %3 {offsets = [7, 0], sizes = [1, 32], strides = [1, 1]} : vector<16x32xf32> to vector<1x32xf32>
    %12 = vector.extract_strided_slice %3 {offsets = [8, 0], sizes = [1, 32], strides = [1, 1]} : vector<16x32xf32> to vector<1x32xf32>
    %c0_4 = arith.constant 0 : index
    %c0_5 = arith.constant 0 : index
    %13 = vector.load %arg0[%c0_4, %c0_5] : memref<16x96xf32, #tpu.memory_space<vmem>>, vector<16x96xf32>
    %14 = vector.extract_strided_slice %13 {offsets = [0, 0], sizes = [16, 32], strides = [1, 1]} : vector<16x96xf32> to vector<16x32xf32>
    %c0_6 = arith.constant 0 : index
    %c0_7 = arith.constant 0 : index
    %15 = vector.load %arg1[%c0_6, %c0_7] : memref<96x160xf32, #tpu.memory_space<vmem>>, vector<96x160xf32>
    %cst = arith.constant dense<0.000000e+00> : vector<16x160xf32>
    %16 = tpu.matmul %13, %15, %cst {dimension_numbers = #tpu.dot_dimension_numbers<[1], [0], [0], [1], [0, 0, 1, 1], [], []>} : vector<16x96xf32>, vector<96x160xf32>, vector<16x160xf32> -> vector<16x160xf32>
    %17 = vector.extract_strided_slice %16 {offsets = [0, 0], sizes = [16, 32], strides = [1, 1]} : vector<16x160xf32> to vector<16x32xf32>
    %18 = vector.extract_strided_slice %16 {offsets = [0, 32], sizes = [16, 32], strides = [1, 1]} : vector<16x160xf32> to vector<16x32xf32>
    %19 = vector.extract_strided_slice %16 {offsets = [0, 64], sizes = [16, 32], strides = [1, 1]} : vector<16x160xf32> to vector<16x32xf32>
    %20 = vector.extract_strided_slice %16 {offsets = [0, 96], sizes = [16, 32], strides = [1, 1]} : vector<16x160xf32> to vector<16x32xf32>
    %21 = vector.extract_strided_slice %16 {offsets = [0, 128], sizes = [16, 32], strides = [1, 1]} : vector<16x160xf32> to vector<16x32xf32>
    %c0_8 = arith.constant 0 : index
    %c0_9 = arith.constant 0 : index
    %c0_10 = arith.constant 0 : index
    %22 = vector.load %arg2[%c0_8, %c0_9, %c0_10] : memref<3x32x32xf32, #tpu.memory_space<vmem>>, vector<1x32x32xf32>
    %23 = vector.shape_cast %22 : vector<1x32x32xf32> to vector<32x32xf32>
    %24 = tpu.concatenate %17, %17, %17, %17, %17, %17, %17, %17 in 0 : vector<16x32xf32>, vector<16x32xf32>, vector<16x32xf32>, vector<16x32xf32>, vector<16x32xf32>, vector<16x32xf32>, vector<16x32xf32>, vector<16x32xf32> -> vector<128x32xf32>
    %25 = arith.mulf %24, %0 : vector<128x32xf32>
    %cst_11 = arith.constant dense<0.000000e+00> : vector<128x16xf32>
    %26 = tpu.matmul %25, %18, %cst_11 {dimension_numbers = #tpu.dot_dimension_numbers<[1], [1], [0], [0], [0, 0, 1, 0], [], []>} : vector<128x32xf32>, vector<16x32xf32>, vector<128x16xf32> -> vector<128x16xf32>
    %27 = arith.addf %26, %1 : vector<128x16xf32>
    %cst_12 = arith.constant dense<0xFF800000> : vector<128xf32>
    %28 = vector.multi_reduction <maximumf>, %27, %cst_12 [1] : vector<128x16xf32> to vector<128xf32>
    %29 = vector.shape_cast %28 : vector<128xf32> to vector<128x1xf32>
    %30 = vector.broadcast %29 : vector<128x1xf32> to vector<128x16xf32>
    %31 = arith.subf %27, %30 : vector<128x16xf32>
    %32 = math.exp %31 : vector<128x16xf32>
    %cst_13 = arith.constant dense<0.000000e+00> : vector<128xf32>
    %33 = vector.multi_reduction <add>, %32, %cst_13 [1] : vector<128x16xf32> to vector<128xf32>
    %34 = vector.shape_cast %33 : vector<128xf32> to vector<128x1xf32>
    %35 = tpu.reciprocal %34 {approx = true} : vector<128x1xf32> -> vector<128x1xf32>
    %36 = vector.broadcast %35 : vector<128x1xf32> to vector<128x16xf32>
    %37 = arith.mulf %32, %36 : vector<128x16xf32>
    %cst_14 = arith.constant dense<0.000000e+00> : vector<128x32xf32>
    %38 = tpu.matmul %37, %19, %cst_14 {dimension_numbers = #tpu.dot_dimension_numbers<[1], [0], [0], [1], [0, 0, 1, 1], [], []>} : vector<128x16xf32>, vector<16x32xf32>, vector<128x32xf32> -> vector<128x32xf32>
    %39 = arith.mulf %38, %0 : vector<128x32xf32>
    %40 = vector.extract_strided_slice %39 {offsets = [0, 0], sizes = [16, 32], strides = [1, 1]} : vector<128x32xf32> to vector<16x32xf32>
    %41 = vector.extract_strided_slice %39 {offsets = [16, 0], sizes = [16, 32], strides = [1, 1]} : vector<128x32xf32> to vector<16x32xf32>
    %42 = vector.extract_strided_slice %39 {offsets = [32, 0], sizes = [16, 32], strides = [1, 1]} : vector<128x32xf32> to vector<16x32xf32>
    %43 = vector.extract_strided_slice %39 {offsets = [48, 0], sizes = [16, 32], strides = [1, 1]} : vector<128x32xf32> to vector<16x32xf32>
    %44 = vector.extract_strided_slice %39 {offsets = [64, 0], sizes = [16, 32], strides = [1, 1]} : vector<128x32xf32> to vector<16x32xf32>
    %45 = vector.extract_strided_slice %39 {offsets = [80, 0], sizes = [16, 32], strides = [1, 1]} : vector<128x32xf32> to vector<16x32xf32>
    %46 = vector.extract_strided_slice %39 {offsets = [96, 0], sizes = [16, 32], strides = [1, 1]} : vector<128x32xf32> to vector<16x32xf32>
    %47 = vector.extract_strided_slice %39 {offsets = [112, 0], sizes = [16, 32], strides = [1, 1]} : vector<128x32xf32> to vector<16x32xf32>
    %48 = arith.addf %40, %41 : vector<16x32xf32>
    %49 = arith.addf %42, %43 : vector<16x32xf32>
    %50 = arith.addf %44, %45 : vector<16x32xf32>
    %51 = arith.addf %46, %47 : vector<16x32xf32>
    %52 = arith.addf %48, %49 : vector<16x32xf32>
    %53 = arith.addf %50, %51 : vector<16x32xf32>
    %54 = arith.addf %52, %53 : vector<16x32xf32>
    %cst_15 = arith.constant dense<0.000000e+00> : vector<16x32xf32>
    %55 = tpu.matmul %54, %23, %cst_15 {dimension_numbers = #tpu.dot_dimension_numbers<[1], [0], [0], [1], [0, 0, 1, 1], [], []>} : vector<16x32xf32>, vector<32x32xf32>, vector<16x32xf32> -> vector<16x32xf32>
    %56 = vector.broadcast %4 : vector<1x32xf32> to vector<16x32xf32>
    %57 = arith.addf %55, %56 : vector<16x32xf32>
    %58 = arith.addf %57, %14 : vector<16x32xf32>
    %cst_16 = arith.constant dense<0.000000e+00> : vector<16xf32>
    %59 = vector.multi_reduction <add>, %58, %cst_16 [1] : vector<16x32xf32> to vector<16xf32>
    %60 = vector.shape_cast %59 : vector<16xf32> to vector<16x1xf32>
    %cst_17 = arith.constant 3.200000e+01 : f32
    %61 = vector.broadcast %cst_17 : f32 to vector<16x1xf32>
    %62 = arith.divf %60, %61 : vector<16x1xf32>
    %63 = vector.broadcast %62 : vector<16x1xf32> to vector<16x32xf32>
    %64 = arith.subf %58, %63 : vector<16x32xf32>
    %65 = arith.mulf %64, %64 : vector<16x32xf32>
    %cst_18 = arith.constant dense<0.000000e+00> : vector<16xf32>
    %66 = vector.multi_reduction <add>, %65, %cst_18 [1] : vector<16x32xf32> to vector<16xf32>
    %67 = vector.shape_cast %66 : vector<16xf32> to vector<16x1xf32>
    %cst_19 = arith.constant 3.200000e+01 : f32
    %68 = vector.broadcast %cst_19 : f32 to vector<16x1xf32>
    %69 = arith.divf %67, %68 : vector<16x1xf32>
    %70 = vector.broadcast %62 : vector<16x1xf32> to vector<16x32xf32>
    %71 = arith.subf %58, %70 : vector<16x32xf32>
    %cst_20 = arith.constant 9.99999974E-6 : f32
    %72 = vector.broadcast %cst_20 : f32 to vector<16x1xf32>
    %73 = arith.addf %69, %72 : vector<16x1xf32>
    %74 = math.rsqrt %73 : vector<16x1xf32>
    %75 = vector.broadcast %74 : vector<16x1xf32> to vector<16x32xf32>
    %76 = arith.mulf %71, %75 : vector<16x32xf32>
    %77 = vector.broadcast %6 : vector<1x32xf32> to vector<16x32xf32>
    %78 = arith.mulf %76, %77 : vector<16x32xf32>
    %79 = vector.broadcast %7 : vector<1x32xf32> to vector<16x32xf32>
    %80 = arith.addf %78, %79 : vector<16x32xf32>
    %c2 = arith.constant 2 : index
    %c0_21 = arith.constant 0 : index
    %c0_22 = arith.constant 0 : index
    %81 = vector.load %arg2[%c2, %c0_21, %c0_22] : memref<3x32x32xf32, #tpu.memory_space<vmem>>, vector<1x32x32xf32>
    %82 = vector.shape_cast %81 : vector<1x32x32xf32> to vector<32x32xf32>
    %cst_23 = arith.constant dense<0.000000e+00> : vector<16x32xf32>
    %83 = tpu.matmul %80, %82, %cst_23 {dimension_numbers = #tpu.dot_dimension_numbers<[1], [0], [0], [1], [0, 0, 1, 1], [], []>} : vector<16x32xf32>, vector<32x32xf32>, vector<16x32xf32> -> vector<16x32xf32>
    %c1 = arith.constant 1 : index
    %c0_24 = arith.constant 0 : index
    %c0_25 = arith.constant 0 : index
    %84 = vector.load %arg2[%c1, %c0_24, %c0_25] : memref<3x32x32xf32, #tpu.memory_space<vmem>>, vector<1x32x32xf32>
    %85 = vector.shape_cast %84 : vector<1x32x32xf32> to vector<32x32xf32>
    %86 = tpu.concatenate %20, %20, %20, %20, %20, %20, %20, %20 in 0 : vector<16x32xf32>, vector<16x32xf32>, vector<16x32xf32>, vector<16x32xf32>, vector<16x32xf32>, vector<16x32xf32>, vector<16x32xf32>, vector<16x32xf32> -> vector<128x32xf32>
    %87 = arith.mulf %86, %0 : vector<128x32xf32>
    %cst_26 = arith.constant dense<0.000000e+00> : vector<128x16xf32>
    %88 = tpu.matmul %87, %21, %cst_26 {dimension_numbers = #tpu.dot_dimension_numbers<[1], [1], [0], [0], [0, 0, 1, 0], [], []>} : vector<128x32xf32>, vector<16x32xf32>, vector<128x16xf32> -> vector<128x16xf32>
    %89 = arith.addf %88, %2 : vector<128x16xf32>
    %cst_27 = arith.constant dense<0xFF800000> : vector<128xf32>
    %90 = vector.multi_reduction <maximumf>, %89, %cst_27 [1] : vector<128x16xf32> to vector<128xf32>
    %91 = vector.shape_cast %90 : vector<128xf32> to vector<128x1xf32>
    %92 = vector.broadcast %91 : vector<128x1xf32> to vector<128x16xf32>
    %93 = arith.subf %89, %92 : vector<128x16xf32>
    %94 = math.exp %93 : vector<128x16xf32>
    %cst_28 = arith.constant dense<0.000000e+00> : vector<128xf32>
    %95 = vector.multi_reduction <add>, %94, %cst_28 [1] : vector<128x16xf32> to vector<128xf32>
    %96 = vector.shape_cast %95 : vector<128xf32> to vector<128x1xf32>
    %97 = tpu.reciprocal %96 {approx = true} : vector<128x1xf32> -> vector<128x1xf32>
    %98 = vector.broadcast %97 : vector<128x1xf32> to vector<128x16xf32>
    %99 = arith.mulf %94, %98 : vector<128x16xf32>
    %cst_29 = arith.constant dense<0.000000e+00> : vector<128x32xf32>
    %100 = tpu.matmul %99, %83, %cst_29 {dimension_numbers = #tpu.dot_dimension_numbers<[1], [0], [0], [1], [0, 0, 1, 1], [], []>} : vector<128x16xf32>, vector<16x32xf32>, vector<128x32xf32> -> vector<128x32xf32>
    %101 = arith.mulf %100, %0 : vector<128x32xf32>
    %102 = vector.extract_strided_slice %101 {offsets = [0, 0], sizes = [16, 32], strides = [1, 1]} : vector<128x32xf32> to vector<16x32xf32>
    %103 = vector.extract_strided_slice %101 {offsets = [16, 0], sizes = [16, 32], strides = [1, 1]} : vector<128x32xf32> to vector<16x32xf32>
    %104 = vector.extract_strided_slice %101 {offsets = [32, 0], sizes = [16, 32], strides = [1, 1]} : vector<128x32xf32> to vector<16x32xf32>
    %105 = vector.extract_strided_slice %101 {offsets = [48, 0], sizes = [16, 32], strides = [1, 1]} : vector<128x32xf32> to vector<16x32xf32>
    %106 = vector.extract_strided_slice %101 {offsets = [64, 0], sizes = [16, 32], strides = [1, 1]} : vector<128x32xf32> to vector<16x32xf32>
    %107 = vector.extract_strided_slice %101 {offsets = [80, 0], sizes = [16, 32], strides = [1, 1]} : vector<128x32xf32> to vector<16x32xf32>
    %108 = vector.extract_strided_slice %101 {offsets = [96, 0], sizes = [16, 32], strides = [1, 1]} : vector<128x32xf32> to vector<16x32xf32>
    %109 = vector.extract_strided_slice %101 {offsets = [112, 0], sizes = [16, 32], strides = [1, 1]} : vector<128x32xf32> to vector<16x32xf32>
    %110 = arith.addf %102, %103 : vector<16x32xf32>
    %111 = arith.addf %104, %105 : vector<16x32xf32>
    %112 = arith.addf %106, %107 : vector<16x32xf32>
    %113 = arith.addf %108, %109 : vector<16x32xf32>
    %114 = arith.addf %110, %111 : vector<16x32xf32>
    %115 = arith.addf %112, %113 : vector<16x32xf32>
    %116 = arith.addf %114, %115 : vector<16x32xf32>
    %cst_30 = arith.constant dense<0.000000e+00> : vector<16x32xf32>
    %117 = tpu.matmul %116, %85, %cst_30 {dimension_numbers = #tpu.dot_dimension_numbers<[1], [0], [0], [1], [0, 0, 1, 1], [], []>} : vector<16x32xf32>, vector<32x32xf32>, vector<16x32xf32> -> vector<16x32xf32>
    %118 = vector.broadcast %5 : vector<1x32xf32> to vector<16x32xf32>
    %119 = arith.addf %117, %118 : vector<16x32xf32>
    %120 = arith.addf %119, %80 : vector<16x32xf32>
    %cst_31 = arith.constant dense<0.000000e+00> : vector<16xf32>
    %121 = vector.multi_reduction <add>, %120, %cst_31 [1] : vector<16x32xf32> to vector<16xf32>
    %122 = vector.shape_cast %121 : vector<16xf32> to vector<16x1xf32>
    %cst_32 = arith.constant 3.200000e+01 : f32
    %123 = vector.broadcast %cst_32 : f32 to vector<16x1xf32>
    %124 = arith.divf %122, %123 : vector<16x1xf32>
    %125 = vector.broadcast %124 : vector<16x1xf32> to vector<16x32xf32>
    %126 = arith.subf %120, %125 : vector<16x32xf32>
    %127 = arith.mulf %126, %126 : vector<16x32xf32>
    %cst_33 = arith.constant dense<0.000000e+00> : vector<16xf32>
    %128 = vector.multi_reduction <add>, %127, %cst_33 [1] : vector<16x32xf32> to vector<16xf32>
    %129 = vector.shape_cast %128 : vector<16xf32> to vector<16x1xf32>
    %cst_34 = arith.constant 3.200000e+01 : f32
    %130 = vector.broadcast %cst_34 : f32 to vector<16x1xf32>
    %131 = arith.divf %129, %130 : vector<16x1xf32>
    %132 = vector.broadcast %124 : vector<16x1xf32> to vector<16x32xf32>
    %133 = arith.subf %120, %132 : vector<16x32xf32>
    %cst_35 = arith.constant 9.99999974E-6 : f32
    %134 = vector.broadcast %cst_35 : f32 to vector<16x1xf32>
    %135 = arith.addf %131, %134 : vector<16x1xf32>
    %136 = math.rsqrt %135 : vector<16x1xf32>
    %137 = vector.broadcast %136 : vector<16x1xf32> to vector<16x32xf32>
    %138 = arith.mulf %133, %137 : vector<16x32xf32>
    %139 = vector.broadcast %8 : vector<1x32xf32> to vector<16x32xf32>
    %140 = arith.mulf %138, %139 : vector<16x32xf32>
    %141 = vector.broadcast %9 : vector<1x32xf32> to vector<16x32xf32>
    %142 = arith.addf %140, %141 : vector<16x32xf32>
    %c0_36 = arith.constant 0 : index
    %c0_37 = arith.constant 0 : index
    %143 = vector.load %arg3[%c0_36, %c0_37] : memref<32x128xf32, #tpu.memory_space<vmem>>, vector<32x128xf32>
    %cst_38 = arith.constant dense<0.000000e+00> : vector<16x128xf32>
    %144 = tpu.matmul %142, %143, %cst_38 {dimension_numbers = #tpu.dot_dimension_numbers<[1], [0], [0], [1], [0, 0, 1, 1], [], []>} : vector<16x32xf32>, vector<32x128xf32>, vector<16x128xf32> -> vector<16x128xf32>
    %c0_39 = arith.constant 0 : index
    %c0_40 = arith.constant 0 : index
    %145 = vector.load %arg4[%c0_39, %c0_40] : memref<1x128xf32, #tpu.memory_space<vmem>>, vector<1x128xf32>
    %146 = vector.broadcast %145 : vector<1x128xf32> to vector<16x128xf32>
    %147 = arith.addf %144, %146 : vector<16x128xf32>
    %cst_41 = arith.constant 0.000000e+00 : f32
    %148 = vector.broadcast %cst_41 : f32 to vector<16x128xf32>
    %149 = arith.maximumf %147, %148 : vector<16x128xf32>
    %c0_42 = arith.constant 0 : index
    %c0_43 = arith.constant 0 : index
    %150 = vector.load %arg5[%c0_42, %c0_43] : memref<128x32xf32, #tpu.memory_space<vmem>>, vector<128x32xf32>
    %cst_44 = arith.constant dense<0.000000e+00> : vector<16x32xf32>
    %151 = tpu.matmul %149, %150, %cst_44 {dimension_numbers = #tpu.dot_dimension_numbers<[1], [0], [0], [1], [0, 0, 1, 1], [], []>} : vector<16x128xf32>, vector<128x32xf32>, vector<16x32xf32> -> vector<16x32xf32>
    %152 = vector.broadcast %12 : vector<1x32xf32> to vector<16x32xf32>
    %153 = arith.addf %151, %152 : vector<16x32xf32>
    %154 = arith.addf %153, %142 : vector<16x32xf32>
    %cst_45 = arith.constant dense<0.000000e+00> : vector<16xf32>
    %155 = vector.multi_reduction <add>, %154, %cst_45 [1] : vector<16x32xf32> to vector<16xf32>
    %156 = vector.shape_cast %155 : vector<16xf32> to vector<16x1xf32>
    %cst_46 = arith.constant 3.200000e+01 : f32
    %157 = vector.broadcast %cst_46 : f32 to vector<16x1xf32>
    %158 = arith.divf %156, %157 : vector<16x1xf32>
    %159 = vector.broadcast %158 : vector<16x1xf32> to vector<16x32xf32>
    %160 = arith.subf %154, %159 : vector<16x32xf32>
    %161 = arith.mulf %160, %160 : vector<16x32xf32>
    %cst_47 = arith.constant dense<0.000000e+00> : vector<16xf32>
    %162 = vector.multi_reduction <add>, %161, %cst_47 [1] : vector<16x32xf32> to vector<16xf32>
    %163 = vector.shape_cast %162 : vector<16xf32> to vector<16x1xf32>
    %cst_48 = arith.constant 3.200000e+01 : f32
    %164 = vector.broadcast %cst_48 : f32 to vector<16x1xf32>
    %165 = arith.divf %163, %164 : vector<16x1xf32>
    %166 = vector.broadcast %158 : vector<16x1xf32> to vector<16x32xf32>
    %167 = arith.subf %154, %166 : vector<16x32xf32>
    %cst_49 = arith.constant 9.99999974E-6 : f32
    %168 = vector.broadcast %cst_49 : f32 to vector<16x1xf32>
    %169 = arith.addf %165, %168 : vector<16x1xf32>
    %170 = math.rsqrt %169 : vector<16x1xf32>
    %171 = vector.broadcast %170 : vector<16x1xf32> to vector<16x32xf32>
    %172 = arith.mulf %167, %171 : vector<16x32xf32>
    %173 = vector.broadcast %10 : vector<1x32xf32> to vector<16x32xf32>
    %174 = arith.mulf %172, %173 : vector<16x32xf32>
    %175 = vector.broadcast %11 : vector<1x32xf32> to vector<16x32xf32>
    %176 = arith.addf %174, %175 : vector<16x32xf32>
    %c0_50 = arith.constant 0 : index
    %c0_51 = arith.constant 0 : index
    %177 = vector.load %arg7[%c0_50, %c0_51] : memref<16x32xf32, #tpu.memory_space<vmem>>, vector<16x32xf32>
    tpu.vector_store %arg7[%c0_50, %c0_51], %176 {strides = array<i32>} : memref<16x32xf32, #tpu.memory_space<vmem>>, vector<16x32xf32>,
    return
  }
}

</mosaic_0001>

<llo_original>
// kernel: tpu_custom_call.1
$region0: #{tpu_custom_call.1}
  #allocation0 [shape = 'u32[]', space=smem, size = 0x4, offset = 0x4, fixed_abs, tag = 'smem constant byte address 0x4 - core index']
  #allocation1 [shape = 'u32[144,128]{1,0:T(1,128)}', space=vmem, size = 0x12000, scoped, tag = 'internal scratch']
  %s0 = inlined_call_operand.vmem [shape: f32[16,96], index: 0, kind: input, shape index: {}]
  %s1 = inlined_call_operand.vmem [shape: f32[96,160], index: 1, kind: input, shape index: {}]
  %s2 = inlined_call_operand.vmem [shape: f32[3,32,32], index: 2, kind: input, shape index: {}]
  %s3 = inlined_call_operand.vmem [shape: f32[32,128], index: 3, kind: input, shape index: {}]
  %s4 = inlined_call_operand.vmem [shape: f32[1,128], index: 4, kind: input, shape index: {}]
  %s5 = inlined_call_operand.vmem [shape: f32[128,32], index: 5, kind: input, shape index: {}]
  %s6 = inlined_call_operand.vmem [shape: f32[128,96], index: 6, kind: input, shape index: {}]
  %s7 = inlined_call_operand.hbm [shape: f32[16,32], index: 7, kind: output, shape index: {}]
  %s8 = sld [smem:[#allocation0]]
  $region38: #{tpu_custom_call.1} parent=0
    _
  %s10 = ssub.s32 1, %s8
  %s11 = scalar_select 0, %s10, %s8
  $region1: #{tpu_custom_call.1} parent=0
    #allocation2 [shape = 'u8[8192]{0}', space=vmem, size = 0x2000, scoped, tag = 'output window, operand 0, single buffered']
    #allocation3 [shape = 's32[1]{0}', space=sflag, size = 0x4, scoped, tag = 'scoped memory for tpu_custom_call.1']
    %12 = vsyncpa [#allocation3], 0
    // Predicated region
    $region2: #{tpu_custom_call.1} parent=1 // pred_check
      _
    $region3: #{tpu_custom_call.1} parent=1 // pred_check_branch
      %14 = sbr.rel (0) target = $region5
    $region4: #{tpu_custom_call.1} parent=1 // pred_region
      _
    $region5: #{tpu_custom_call.1} parent=1 // pred_fallthru
      _
    // Predicated region
    $region6: #{tpu_custom_call.1} parent=1 // pred_check
      _
    $region7: #{tpu_custom_call.1} parent=1 // pred_check_branch
      %16 = sbr.rel (0) target = $region9
    $region8: #{tpu_custom_call.1} parent=1 // pred_region
      _
    $region9: #{tpu_custom_call.1} parent=1 // pred_fallthru
      _
    // Predicated region
    $region10: #{tpu_custom_call.1} parent=1 // pred_check
      _
    $region11: #{tpu_custom_call.1} parent=1 // pred_check_branch
      %18 = sbr.rel (0) target = $region13
    $region12: #{tpu_custom_call.1} parent=1 // pred_region
      _
    $region13: #{tpu_custom_call.1} parent=1 // pred_fallthru
      _
    // Predicated region
    $region14: #{tpu_custom_call.1} parent=1 // pred_check
      _
    $region15: #{tpu_custom_call.1} parent=1 // pred_check_branch
      %20 = sbr.rel (0) target = $region17
    $region16: #{tpu_custom_call.1} parent=1 // pred_region
      _
    $region17: #{tpu_custom_call.1} parent=1 // pred_fallthru
      _
    // Predicated region
    $region18: #{tpu_custom_call.1} parent=1 // pred_check
      _
    $region19: #{tpu_custom_call.1} parent=1 // pred_check_branch
      %22 = sbr.rel (0) target = $region21
    $region20: #{tpu_custom_call.1} parent=1 // pred_region
      _
    $region21: #{tpu_custom_call.1} parent=1 // pred_fallthru
      _
    // Predicated region
    $region22: #{tpu_custom_call.1} parent=1 // pred_check
      _
    $region23: #{tpu_custom_call.1} parent=1 // pred_check_branch
      %24 = sbr.rel (0) target = $region25
    $region24: #{tpu_custom_call.1} parent=1 // pred_region
      _
    $region25: #{tpu_custom_call.1} parent=1 // pred_fallthru
      _
    // Predicated region
    $region26: #{tpu_custom_call.1} parent=1 // pred_check
      _
    $region27: #{tpu_custom_call.1} parent=1 // pred_check_branch
      %26 = sbr.rel (0) target = $region29
    $region28: #{tpu_custom_call.1} parent=1 // pred_region
      _
    $region29: #{tpu_custom_call.1} parent=1 // pred_fallthru
      _
    %v27 = vld [vmem:[%s6] sm:$0xff]
    %v28 = vld [vmem:[%s6 + $0x8] sm:$0xff]
    %v29 = vld [vmem:[%s6 + $0x10] sm:$0xff]
    %v30 = vld [vmem:[%s6 + $0x18] sm:$0xff]
    %v31 = vld [vmem:[%s6 + $0x20] sm:$0xff]
    %v32 = vld [vmem:[%s6 + $0x28] sm:$0xff]
    %v33 = vld [vmem:[%s6 + $0x30] sm:$0xff]
    %v34 = vld [vmem:[%s6 + $0x38] sm:$0xff]
    %v35 = vld [vmem:[%s6 + $0x40] sm:$0xff]
    %v36 = vld [vmem:[%s6 + $0x48] sm:$0xff]
    %v37 = vld [vmem:[%s6 + $0x50] sm:$0xff]
    %v38 = vld [vmem:[%s6 + $0x58] sm:$0xff]
    %v39 = vld [vmem:[%s6 + $0x60] sm:$0xff]
    %v40 = vld [vmem:[%s6 + $0x68] sm:$0xff]
    %v41 = vld [vmem:[%s6 + $0x70] sm:$0xff]
    %v42 = vld [vmem:[%s6 + $0x78] sm:$0xff]
    %v43 = vld [vmem:[%s0] sm:$0xff]
    %v44 = vld [vmem:[%s0 + $0x8] sm:$0xff]
    %v45 = vld [vmem:[%s1] sm:$0xff]
    %v46 = vld [vmem:[%s1 + $0x8] sm:$0xff]
    %v47 = vld [vmem:[%s1 + $0x10] sm:$0xff]
    %v48 = vld [vmem:[%s1 + $0x18] sm:$0xff]
    %v49 = vld [vmem:[%s1 + $0x20] sm:$0xff]
    %v50 = vld [vmem:[%s1 + $0x28] sm:$0xff]
    %v51 = vld [vmem:[%s1 + $0x30] sm:$0xff]
    %v52 = vld [vmem:[%s1 + $0x38] sm:$0xff]
    %v53 = vld [vmem:[%s1 + $0x40] sm:$0xff]
    %v54 = vld [vmem:[%s1 + $0x48] sm:$0xff]
    %v55 = vld [vmem:[%s1 + $0x50] sm:$0xff]
    %v56 = vld [vmem:[%s1 + $0x58] sm:$0xff]
    %v57 = vld [vmem:[%s1 + $0x60] sm:$0xff]
    %v58 = vld [vmem:[%s1 + $0x68] sm:$0xff]
    %v59 = vld [vmem:[%s1 + $0x70] sm:$0xff]
    %v60 = vld [vmem:[%s1 + $0x78] sm:$0xff]
    %v61 = vld [vmem:[%s1 + $0x80] sm:$0xff]
    %v62 = vld [vmem:[%s1 + $0x88] sm:$0xff]
    %v63 = vld [vmem:[%s1 + $0x90] sm:$0xff]
    %v64 = vld [vmem:[%s1 + $0x98] sm:$0xff]
    %v65 = vld [vmem:[%s1 + $0xa0] sm:$0xff]
    %v66 = vld [vmem:[%s1 + $0xa8] sm:$0xff]
    %v67 = vld [vmem:[%s1 + $0xb0] sm:$0xff]
    %v68 = vld [vmem:[%s1 + $0xb8] sm:$0xff]
    %vm69 = vcmask 785408
    %v71 = vsel %vm69, %v43, 0
    %v74 = vsel %vm69, %v44, 0
    %76 = vmatprep.subr.mxu0 %v46
    %77 = vmatpush1.msra.mxu0 %v45
    %78 = vmatprep.subr.mxu0 %v48
    %79 = vmatpush1.msra.mxu0 %v47
    %80 = vmatprep.subr.mxu0 %v50
    %81 = vmatpush1.msra.mxu0 %v49
    %82 = vmatprep.subr.mxu0 %v52
    %83 = vmatpush1.msra.mxu0 %v51
    %84 = vmatprep.subr.mxu0 %v54
    %85 = vmatpush1.msra.mxu0 %v53
    %86 = vmatprep.subr.mxu0 %v56
    %87 = vmatpush1.msra.mxu0 %v55
    %88 = vmatprep.subr.mxu0 %v58
    %89 = vmatpush1.msra.mxu0 %v57
    %90 = vmatprep.subr.mxu0 %v60
    %91 = vmatpush1.msra.mxu0 %v59
    %92 = vmatprep.subr.mxu0 %v62
    %93 = vmatpush1.msra.mxu0 %v61
    %94 = vmatprep.subr.mxu0 %v64
    %95 = vmatpush1.msra.mxu0 %v63
    %96 = vmatprep.subr.mxu0 %v66
    %97 = vmatpush1.msra.mxu0 %v65
    %98 = vmatprep.subr.mxu0 %v68
    %99 = vmatpush1.msra.mxu0 %v67
    %100 = vmatprep.subr.mxu0 0.0
    %101 = vmatpush1.msra.mxu0 0.0
    %102 = vmatprep.subr.mxu0 0.0
    %103 = vmatpush1.msra.mxu0 0.0
    %104 = vmatprep.subr.mxu0 0.0
    %105 = vmatpush1.msra.mxu0 0.0
    %106 = vmatprep.subr.mxu0 0.0
    %107 = vmatpush1.msra.mxu0 0.0
    %108 = vmatprep.subr.mxu0 0.0
    %109 = vmatpush1.msra.mxu0 0.0
    %110 = vmatprep.subr.mxu0 0.0
    %111 = vmatpush1.msra.mxu0 0.0
    %112 = vmatprep.subr.mxu0 0.0
    %113 = vmatpush1.msra.mxu0 0.0
    %114 = vmatprep.subr.mxu0 0.0
    %115 = vmatpush1.msra.mxu0 0.0
    %116 = vmatprep.subr.mxu0 0.0
    %117 = vmatpush1.msra.mxu0 0.0
    %118 = vmatprep.subr.mxu0 0.0
    %119 = vmatpush1.msra.mxu0 0.0
    %120 = vmatprep.subr.mxu0 0.0
    %121 = vmatpush1.msra.mxu0 0.0
    %122 = vmatprep.subr.mxu0 0.0
    %123 = vmatpush1.msra.mxu0 0.0
    %124 = vmatprep.subr.mxu0 0.0
    %125 = vmatpush1.msra.mxu0 0.0
    %126 = vmatprep.subr.mxu0 0.0
    %127 = vmatpush1.msra.mxu0 0.0
    %128 = vmatprep.subr.mxu0 0.0
    %129 = vmatpush1.msra.mxu0 0.0
    %130 = vmatprep.subr.mxu0 0.0
    %131 = vmatpush1.msra.mxu0 0.0
    %132 = vmatprep.subr.mxu0 0.0
    %133 = vmatpush1.msra.mxu0 0.0
    %134 = vmatprep.subr.mxu0 0.0
    %135 = vmatpush1.msra.mxu0 0.0
    %136 = vmatprep.subr.mxu0 0.0
    %137 = vmatpush1.msra.mxu0 0.0
    %138 = vmatprep.subr.mxu0 0.0
    %139 = vmatpush1.msra.mxu0 0.0
    %140 = vmatprep.mubr.f32.mxu0 0.0
    %141 = vmatmul.mubr.f32.gmra.mrb[0].mxu0 %v71
    %v142 = vpop.f32.mrb[0].mxu0
    %v143 = vadd.f32 0.0, %v142
    %v144 = vpop.f32.mrb[0].mxu0
    %v145 = vadd.f32 0.0, %v144
    %146 = vmatprep.mubr.f32.mxu0 0.0
    %147 = vmatmul.mubr.f32.gmra.mrb[0].mxu0 %v74
    %v148 = vpop.f32.mrb[0].mxu0
    %v149 = vadd.f32 0.0, %v148
    %v150 = vpop.f32.mrb[0].mxu0
    %v151 = vadd.f32 0.0, %v150
    %152 = vdwg.mxu0
    %v153 = vld [vmem:[%s2] sm:$0xff]
    %v154 = vld [vmem:[%s2 + $0x8] sm:$0xff]
    %v155 = vld [vmem:[%s2 + $0x10] sm:$0xff]
    %v156 = vld [vmem:[%s2 + $0x18] sm:$0xff]
    %v157 = vmul.f32 %v143, %v27
    %v158 = vmul.f32 %v149, %v28
    %v159 = vmul.f32 %v143, %v29
    %v160 = vmul.f32 %v149, %v30
    %v161 = vmul.f32 %v143, %v31
    %v162 = vmul.f32 %v149, %v32
    %v163 = vmul.f32 %v143, %v33
    %v164 = vmul.f32 %v149, %v34
    %v165 = vmul.f32 %v143, %v35
    %v166 = vmul.f32 %v149, %v36
    %v167 = vmul.f32 %v143, %v37
    %v168 = vmul.f32 %v149, %v38
    %v169 = vmul.f32 %v143, %v39
    %v170 = vmul.f32 %v149, %v40
    %v171 = vmul.f32 %v143, %v41
    %v172 = vmul.f32 %v149, %v42
    %175 = vrot.lane.b32.xlu0 %v143, 96
    %v176 = vpop.permute.xlu0 %175
    %177 = vrot.lane.b32.xlu0 %v149, 96
    %v178 = vpop.permute.xlu0 %177
    %195 = vrot.lane.b32.xlu0 %v27, 96
    %v196 = vpop.permute.xlu0 %195
    %197 = vrot.lane.b32.xlu0 %v28, 96
    %v198 = vpop.permute.xlu0 %197
    %199 = vrot.lane.b32.xlu0 %v29, 96
    %v200 = vpop.permute.xlu0 %199
    %201 = vrot.lane.b32.xlu0 %v30, 96
    %v202 = vpop.permute.xlu0 %201
    %203 = vrot.lane.b32.xlu0 %v31, 96
    %v204 = vpop.permute.xlu0 %203
    %205 = vrot.lane.b32.xlu0 %v32, 96
    %v206 = vpop.permute.xlu0 %205
    %207 = vrot.lane.b32.xlu0 %v33, 96
    %v208 = vpop.permute.xlu0 %207
    %209 = vrot.lane.b32.xlu0 %v34, 96
    %v210 = vpop.permute.xlu0 %209
    %211 = vrot.lane.b32.xlu0 %v35, 96
    %v212 = vpop.permute.xlu0 %211
    %213 = vrot.lane.b32.xlu0 %v36, 96
    %v214 = vpop.permute.xlu0 %213
    %215 = vrot.lane.b32.xlu0 %v37, 96
    %v216 = vpop.permute.xlu0 %215
    %217 = vrot.lane.b32.xlu0 %v38, 96
    %v218 = vpop.permute.xlu0 %217
    %219 = vrot.lane.b32.xlu0 %v39, 96
    %v220 = vpop.permute.xlu0 %219
    %221 = vrot.lane.b32.xlu0 %v40, 96
    %v222 = vpop.permute.xlu0 %221
    %223 = vrot.lane.b32.xlu0 %v41, 96
    %v224 = vpop.permute.xlu0 %223
    %225 = vrot.lane.b32.xlu0 %v42, 96
    %v226 = vpop.permute.xlu0 %225
    %vm243 = vcmask 261120
    %v245 = vsel %vm243, %v157, 0
    %v248 = vsel %vm243, %v158, 0
    %v251 = vsel %vm243, %v159, 0
    %v254 = vsel %vm243, %v160, 0
    %v257 = vsel %vm243, %v161, 0
    %v260 = vsel %vm243, %v162, 0
    %v263 = vsel %vm243, %v163, 0
    %v266 = vsel %vm243, %v164, 0
    %v269 = vsel %vm243, %v165, 0
    %v272 = vsel %vm243, %v166, 0
    %v275 = vsel %vm243, %v167, 0
    %v278 = vsel %vm243, %v168, 0
    %v281 = vsel %vm243, %v169, 0
    %v284 = vsel %vm243, %v170, 0
    %v287 = vsel %vm243, %v171, 0
    %v290 = vsel %vm243, %v172, 0
    %v292 = vsel %vm243, %v176, 0
    %v294 = vsel %vm243, %v178, 0
    %296 = vmatprep.subr.mxu0 0.0
    %297 = vmatpush1.xpose.msra.mxu0 %v292
    %298 = vmatprep.subr.mxu0 0.0
    %299 = vmatpush1.xpose.msra.mxu0 %v294
    %300 = vmatprep.subr.mxu0 0.0
    %301 = vmatpush1.xpose.msra.mxu0 0.0
    %302 = vmatprep.subr.mxu0 0.0
    %303 = vmatpush1.xpose.msra.mxu0 0.0
    %304 = vmatprep.subr.mxu0 0.0
    %305 = vmatpush1.xpose.msra.mxu0 0.0
    %306 = vmatprep.subr.mxu0 0.0
    %307 = vmatpush1.xpose.msra.mxu0 0.0
    %308 = vmatprep.subr.mxu0 0.0
    %309 = vmatpush1.xpose.msra.mxu0 0.0
    %310 = vmatprep.subr.mxu0 0.0
    %311 = vmatpush1.xpose.msra.mxu0 0.0
    %312 = vmatprep.subr.mxu0 0.0
    %313 = vmatpush1.xpose.msra.mxu0 0.0
    %314 = vmatprep.subr.mxu0 0.0
    %315 = vmatpush1.xpose.msra.mxu0 0.0
    %316 = vmatprep.subr.mxu0 0.0
    %317 = vmatpush1.xpose.msra.mxu0 0.0
    %318 = vmatprep.subr.mxu0 0.0
    %319 = vmatpush1.xpose.msra.mxu0 0.0
    %320 = vmatprep.subr.mxu0 0.0
    %321 = vmatpush1.xpose.msra.mxu0 0.0
    %322 = vmatprep.subr.mxu0 0.0
    %323 = vmatpush1.xpose.msra.mxu0 0.0
    %324 = vmatprep.subr.mxu0 0.0
    %325 = vmatpush1.xpose.msra.mxu0 0.0
    %326 = vmatprep.subr.mxu0 0.0
    %327 = vmatpush1.xpose.msra.mxu0 0.0
    %328 = vmatprep.subr.mxu0 0.0
    %329 = vmatpush1.xpose.msra.mxu0 0.0
    %330 = vmatprep.subr.mxu0 0.0
    %331 = vmatpush1.xpose.msra.mxu0 0.0
    %332 = vmatprep.subr.mxu0 0.0
    %333 = vmatpush1.xpose.msra.mxu0 0.0
    %334 = vmatprep.subr.mxu0 0.0
    %335 = vmatpush1.xpose.msra.mxu0 0.0
    %336 = vmatprep.subr.mxu0 0.0
    %337 = vmatpush1.xpose.msra.mxu0 0.0
    %338 = vmatprep.subr.mxu0 0.0
    %339 = vmatpush1.xpose.msra.mxu0 0.0
    %340 = vmatprep.subr.mxu0 0.0
    %341 = vmatpush1.xpose.msra.mxu0 0.0
    %342 = vmatprep.subr.mxu0 0.0
    %343 = vmatpush1.xpose.msra.mxu0 0.0
    %344 = vmatprep.subr.mxu0 0.0
    %345 = vmatpush1.xpose.msra.mxu0 0.0
    %346 = vmatprep.subr.mxu0 0.0
    %347 = vmatpush1.xpose.msra.mxu0 0.0
    %348 = vmatprep.subr.mxu0 0.0
    %349 = vmatpush1.xpose.msra.mxu0 0.0
    %350 = vmatprep.subr.mxu0 0.0
    %351 = vmatpush1.xpose.msra.mxu0 0.0
    %352 = vmatprep.subr.mxu0 0.0
    %353 = vmatpush1.xpose.msra.mxu0 0.0
    %354 = vmatprep.subr.mxu0 0.0
    %355 = vmatpush1.xpose.msra.mxu0 0.0
    %356 = vmatprep.subr.mxu0 0.0
    %357 = vmatpush1.xpose.msra.mxu0 0.0
    %358 = vmatprep.subr.mxu0 0.0
    %359 = vmatpush1.xpose.msra.mxu0 0.0
    %360 = vmatprep.mubr.f32.mxu0 0.0
    %361 = vmatmul.mubr.f32.gmra.mrb[0].mxu0 %v245
    %v362 = vpop.f32.mrb[0].mxu0
    %v363 = vadd.f32 %v196, %v362
    %v364 = vpop.f32.mrb[0].mxu0
    %365 = vmatprep.mubr.f32.mxu0 0.0
    %366 = vmatmul.mubr.f32.gmra.mrb[0].mxu0 %v248
    %v367 = vpop.f32.mrb[0].mxu0
    %v368 = vadd.f32 %v198, %v367
    %v369 = vpop.f32.mrb[0].mxu0
    %370 = vmatprep.mubr.f32.mxu0 0.0
    %371 = vmatmul.mubr.f32.gmra.mrb[0].mxu0 %v251
    %v372 = vpop.f32.mrb[0].mxu0
    %v373 = vadd.f32 %v200, %v372
    %v374 = vpop.f32.mrb[0].mxu0
    %375 = vmatprep.mubr.f32.mxu0 0.0
    %376 = vmatmul.mubr.f32.gmra.mrb[0].mxu0 %v254
    %v377 = vpop.f32.mrb[0].mxu0
    %v378 = vadd.f32 %v202, %v377
    %v379 = vpop.f32.mrb[0].mxu0
    %380 = vmatprep.mubr.f32.mxu0 0.0
    %381 = vmatmul.mubr.f32.gmra.mrb[0].mxu0 %v257
    %v382 = vpop.f32.mrb[0].mxu0
    %v383 = vadd.f32 %v204, %v382
    %v384 = vpop.f32.mrb[0].mxu0
    %385 = vmatprep.mubr.f32.mxu0 0.0
    %386 = vmatmul.mubr.f32.gmra.mrb[0].mxu0 %v260
    %v387 = vpop.f32.mrb[0].mxu0
    %v388 = vadd.f32 %v206, %v387
    %v389 = vpop.f32.mrb[0].mxu0
    %390 = vmatprep.mubr.f32.mxu0 0.0
    %391 = vmatmul.mubr.f32.gmra.mrb[0].mxu0 %v263
    %v392 = vpop.f32.mrb[0].mxu0
    %v393 = vadd.f32 %v208, %v392
    %v394 = vpop.f32.mrb[0].mxu0
    %395 = vmatprep.mubr.f32.mxu0 0.0
    %396 = vmatmul.mubr.f32.gmra.mrb[0].mxu0 %v266
    %v397 = vpop.f32.mrb[0].mxu0
    %v398 = vadd.f32 %v210, %v397
    %v399 = vpop.f32.mrb[0].mxu0
    %400 = vmatprep.mubr.f32.mxu0 0.0
    %401 = vmatmul.mubr.f32.gmra.mrb[0].mxu0 %v269
    %v402 = vpop.f32.mrb[0].mxu0
    %v403 = vadd.f32 %v212, %v402
    %v404 = vpop.f32.mrb[0].mxu0
    %405 = vmatprep.mubr.f32.mxu0 0.0
    %406 = vmatmul.mubr.f32.gmra.mrb[0].mxu0 %v272
    %v407 = vpop.f32.mrb[0].mxu0
    %v408 = vadd.f32 %v214, %v407
    %v409 = vpop.f32.mrb[0].mxu0
    %410 = vmatprep.mubr.f32.mxu0 0.0
    %411 = vmatmul.mubr.f32.gmra.mrb[0].mxu0 %v275
    %v412 = vpop.f32.mrb[0].mxu0
    %v413 = vadd.f32 %v216, %v412
    %v414 = vpop.f32.mrb[0].mxu0
    %415 = vmatprep.mubr.f32.mxu0 0.0
    %416 = vmatmul.mubr.f32.gmra.mrb[0].mxu0 %v278
    %v417 = vpop.f32.mrb[0].mxu0
    %v418 = vadd.f32 %v218, %v417
    %v419 = vpop.f32.mrb[0].mxu0
    %420 = vmatprep.mubr.f32.mxu0 0.0
    %421 = vmatmul.mubr.f32.gmra.mrb[0].mxu0 %v281
    %v422 = vpop.f32.mrb[0].mxu0
    %v423 = vadd.f32 %v220, %v422
    %v424 = vpop.f32.mrb[0].mxu0
    %425 = vmatprep.mubr.f32.mxu0 0.0
    %426 = vmatmul.mubr.f32.gmra.mrb[0].mxu0 %v284
    %v427 = vpop.f32.mrb[0].mxu0
    %v428 = vadd.f32 %v222, %v427
    %v429 = vpop.f32.mrb[0].mxu0
    %430 = vmatprep.mubr.f32.mxu0 0.0
    %431 = vmatmul.mubr.f32.gmra.mrb[0].mxu0 %v287
    %v432 = vpop.f32.mrb[0].mxu0
    %v433 = vadd.f32 %v224, %v432
    %v434 = vpop.f32.mrb[0].mxu0
    %435 = vmatprep.mubr.f32.mxu0 0.0
    %436 = vmatmul.mubr.f32.gmra.mrb[0].mxu0 %v290
    %v437 = vpop.f32.mrb[0].mxu0
    %v438 = vadd.f32 %v226, %v437
    %v439 = vpop.f32.mrb[0].mxu0
    %440 = vdwg.mxu0
    %vm441 = vcmask 130048
    %v442 = vsel %vm441, %v363, -inf
    %443 = vmax.xlane.f32.xlu0 %v442
    %v444 = vpop.xlane.xlu0 %443
    %v445 = vsel %vm441, %v368, -inf
    %446 = vmax.xlane.f32.xlu0 %v445
    %v447 = vpop.xlane.xlu0 %446
    %v448 = vsel %vm441, %v373, -inf
    %449 = vmax.xlane.f32.xlu0 %v448
    %v450 = vpop.xlane.xlu0 %449
    %v451 = vsel %vm441, %v378, -inf
    %452 = vmax.xlane.f32.xlu0 %v451
    %v453 = vpop.xlane.xlu0 %452
    %v454 = vsel %vm441, %v383, -inf
    %455 = vmax.xlane.f32.xlu0 %v454
    %v456 = vpop.xlane.xlu0 %455
    %v457 = vsel %vm441, %v388, -inf
    %458 = vmax.xlane.f32.xlu0 %v457
    %v459 = vpop.xlane.xlu0 %458
    %v460 = vsel %vm441, %v393, -inf
    %461 = vmax.xlane.f32.xlu0 %v460
    %v462 = vpop.xlane.xlu0 %461
    %v463 = vsel %vm441, %v398, -inf
    %464 = vmax.xlane.f32.xlu0 %v463
    %v465 = vpop.xlane.xlu0 %464
    %v466 = vsel %vm441, %v403, -inf
    %467 = vmax.xlane.f32.xlu0 %v466
    %v468 = vpop.xlane.xlu0 %467
    %v469 = vsel %vm441, %v408, -inf
    %470 = vmax.xlane.f32.xlu0 %v469
    %v471 = vpop.xlane.xlu0 %470
    %v472 = vsel %vm441, %v413, -inf
    %473 = vmax.xlane.f32.xlu0 %v472
    %v474 = vpop.xlane.xlu0 %473
    %v475 = vsel %vm441, %v418, -inf
    %476 = vmax.xlane.f32.xlu0 %v475
    %v477 = vpop.xlane.xlu0 %476
    %v478 = vsel %vm441, %v423, -inf
    %479 = vmax.xlane.f32.xlu0 %v478
    %v480 = vpop.xlane.xlu0 %479
    %v481 = vsel %vm441, %v428, -inf
    %482 = vmax.xlane.f32.xlu0 %v481
    %v483 = vpop.xlane.xlu0 %482
    %v484 = vsel %vm441, %v433, -inf
    %485 = vmax.xlane.f32.xlu0 %v484
    %v486 = vpop.xlane.xlu0 %485
    %v487 = vsel %vm441, %v438, -inf
    %488 = vmax.xlane.f32.xlu0 %v487
    %v489 = vpop.xlane.xlu0 %488
    %v490 = vsub.f32 %v363, %v444
    %v491 = vsub.f32 %v368, %v447
    %v492 = vsub.f32 %v373, %v450
    %v493 = vsub.f32 %v378, %v453
    %v494 = vsub.f32 %v383, %v456
    %v495 = vsub.f32 %v388, %v459
    %v496 = vsub.f32 %v393, %v462
    %v497 = vsub.f32 %v398, %v465
    %v498 = vsub.f32 %v403, %v468
    %v499 = vsub.f32 %v408, %v471
    %v500 = vsub.f32 %v413, %v474
    %v501 = vsub.f32 %v418, %v477
    %v502 = vsub.f32 %v423, %v480
    %v503 = vsub.f32 %v428, %v483
    %v504 = vsub.f32 %v433, %v486
    %v505 = vsub.f32 %v438, %v489
    %v506 = vmul.f32 %v490, 1.442695
    %v507 = vpow.pop %v506
    %v508 = vmul.f32 %v491, 1.442695
    %v509 = vpow.pop %v508
    %v510 = vmul.f32 %v492, 1.442695
    %v511 = vpow.pop %v510
    %v512 = vmul.f32 %v493, 1.442695
    %v513 = vpow.pop %v512
    %v514 = vmul.f32 %v494, 1.442695
    %v515 = vpow.pop %v514
    %v516 = vmul.f32 %v495, 1.442695
    %v517 = vpow.pop %v516
    %v518 = vmul.f32 %v496, 1.442695
    %v519 = vpow.pop %v518
    %v520 = vmul.f32 %v497, 1.442695
    %v521 = vpow.pop %v520
    %v522 = vmul.f32 %v498, 1.442695
    %v523 = vpow.pop %v522
    %v524 = vmul.f32 %v499, 1.442695
    %v525 = vpow.pop %v524
    %v526 = vmul.f32 %v500, 1.442695
    %v527 = vpow.pop %v526
    %v528 = vmul.f32 %v501, 1.442695
    %v529 = vpow.pop %v528
    %v530 = vmul.f32 %v502, 1.442695
    %v531 = vpow.pop %v530
    %v532 = vmul.f32 %v503, 1.442695
    %v533 = vpow.pop %v532
    %v534 = vmul.f32 %v504, 1.442695
    %v535 = vpow.pop %v534
    %v536 = vmul.f32 %v505, 1.442695
    %v537 = vpow.pop %v536
    %v538 = vsel %vm441, %v507, 0.0
    %539 = vadd.xlane.f32.xlu0 %v538
    %v540 = vpop.xlane.xlu0 %539
    %v541 = vsel %vm441, %v509, 0.0
    %542 = vadd.xlane.f32.xlu0 %v541
    %v543 = vpop.xlane.xlu0 %542
    %v544 = vsel %vm441, %v511, 0.0
    %545 = vadd.xlane.f32.xlu0 %v544
    %v546 = vpop.xlane.xlu0 %545
    %v547 = vsel %vm441, %v513, 0.0
    %548 = vadd.xlane.f32.xlu0 %v547
    %v549 = vpop.xlane.xlu0 %548
    %v550 = vsel %vm441, %v515, 0.0
    %551 = vadd.xlane.f32.xlu0 %v550
    %v552 = vpop.xlane.xlu0 %551
    %v553 = vsel %vm441, %v517, 0.0
    %554 = vadd.xlane.f32.xlu0 %v553
    %v555 = vpop.xlane.xlu0 %554
    %v556 = vsel %vm441, %v519, 0.0
    %557 = vadd.xlane.f32.xlu0 %v556
    %v558 = vpop.xlane.xlu0 %557
    %v559 = vsel %vm441, %v521, 0.0
    %560 = vadd.xlane.f32.xlu0 %v559
    %v561 = vpop.xlane.xlu0 %560
    %v562 = vsel %vm441, %v523, 0.0
    %563 = vadd.xlane.f32.xlu0 %v562
    %v564 = vpop.xlane.xlu0 %563
    %v565 = vsel %vm441, %v525, 0.0
    %566 = vadd.xlane.f32.xlu0 %v565
    %v567 = vpop.xlane.xlu0 %566
    %v568 = vsel %vm441, %v527, 0.0
    %569 = vadd.xlane.f32.xlu0 %v568
    %v570 = vpop.xlane.xlu0 %569
    %v571 = vsel %vm441, %v529, 0.0
    %572 = vadd.xlane.f32.xlu0 %v571
    %v573 = vpop.xlane.xlu0 %572
    %v574 = vsel %vm441, %v531, 0.0
    %575 = vadd.xlane.f32.xlu0 %v574
    %v576 = vpop.xlane.xlu0 %575
    %v577 = vsel %vm441, %v533, 0.0
    %578 = vadd.xlane.f32.xlu0 %v577
    %v579 = vpop.xlane.xlu0 %578
    %v580 = vsel %vm441, %v535, 0.0
    %581 = vadd.xlane.f32.xlu0 %v580
    %v582 = vpop.xlane.xlu0 %581
    %v583 = vsel %vm441, %v537, 0.0
    %584 = vadd.xlane.f32.xlu0 %v583
    %v585 = vpop.xlane.xlu0 %584
    %v586 = vrcp.pop %v540
    %v587 = vrcp.pop %v543
    %v588 = vrcp.pop %v546
    %v589 = vrcp.pop %v549
    %v590 = vrcp.pop %v552
    %v591 = vrcp.pop %v555
    %v592 = vrcp.pop %v558
    %v593 = vrcp.pop %v561
    %v594 = vrcp.pop %v564
    %v595 = vrcp.pop %v567
    %v596 = vrcp.pop %v570
    %v597 = vrcp.pop %v573
    %v598 = vrcp.pop %v576
    %v599 = vrcp.pop %v579
    %v600 = vrcp.pop %v582
    %v601 = vrcp.pop %v585
    %v602 = vmul.f32 %v507, %v586
    %v603 = vmul.f32 %v509, %v587
    %v604 = vmul.f32 %v511, %v588
    %v605 = vmul.f32 %v513, %v589
    %v606 = vmul.f32 %v515, %v590
    %v607 = vmul.f32 %v517, %v591
    %v608 = vmul.f32 %v519, %v592
    %v609 = vmul.f32 %v521, %v593
    %v610 = vmul.f32 %v523, %v594
    %v611 = vmul.f32 %v525, %v595
    %v612 = vmul.f32 %v527, %v596
    %v613 = vmul.f32 %v529, %v597
    %v614 = vmul.f32 %v531, %v598
    %v615 = vmul.f32 %v533, %v599
    %v616 = vmul.f32 %v535, %v600
    %v617 = vmul.f32 %v537, %v601
    %618 = vrot.lane.b32.xlu0 %v143, 64
    %v619 = vpop.permute.xlu0 %618
    %620 = vrot.lane.b32.xlu0 %v149, 64
    %v621 = vpop.permute.xlu0 %620
    %v625 = vsel %vm441, %v602, 0
    %v628 = vsel %vm441, %v603, 0
    %v631 = vsel %vm441, %v604, 0
    %v634 = vsel %vm441, %v605, 0
    %v637 = vsel %vm441, %v606, 0
    %v640 = vsel %vm441, %v607, 0
    %v643 = vsel %vm441, %v608, 0
    %v646 = vsel %vm441, %v609, 0
    %v649 = vsel %vm441, %v610, 0
    %v652 = vsel %vm441, %v611, 0
    %v655 = vsel %vm441, %v612, 0
    %v658 = vsel %vm441, %v613, 0
    %v661 = vsel %vm441, %v614, 0
    %v664 = vsel %vm441, %v615, 0
    %v667 = vsel %vm441, %v616, 0
    %v670 = vsel %vm441, %v617, 0
    %672 = vmatprep.subr.mxu0 0.0
    %673 = vmatpush1.msra.mxu0 %v619
    %674 = vmatprep.subr.mxu0 0.0
    %675 = vmatpush1.msra.mxu0 %v621
    %676 = vmatprep.subr.mxu0 0.0
    %677 = vmatpush1.msra.mxu0 0.0
    %678 = vmatprep.subr.mxu0 0.0
    %679 = vmatpush1.msra.mxu0 0.0
    %680 = vmatprep.subr.mxu0 0.0
    %681 = vmatpush1.msra.mxu0 0.0
    %682 = vmatprep.subr.mxu0 0.0
    %683 = vmatpush1.msra.mxu0 0.0
    %684 = vmatprep.subr.mxu0 0.0
    %685 = vmatpush1.msra.mxu0 0.0
    %686 = vmatprep.subr.mxu0 0.0
    %687 = vmatpush1.msra.mxu0 0.0
    %688 = vmatprep.subr.mxu0 0.0
    %689 = vmatpush1.msra.mxu0 0.0
    %690 = vmatprep.subr.mxu0 0.0
    %691 = vmatpush1.msra.mxu0 0.0
    %692 = vmatprep.subr.mxu0 0.0
    %693 = vmatpush1.msra.mxu0 0.0
    %694 = vmatprep.subr.mxu0 0.0
    %695 = vmatpush1.msra.mxu0 0.0
    %696 = vmatprep.subr.mxu0 0.0
    %697 = vmatpush1.msra.mxu0 0.0
    %698 = vmatprep.subr.mxu0 0.0
    %699 = vmatpush1.msra.mxu0 0.0
    %700 = vmatprep.subr.mxu0 0.0
    %701 = vmatpush1.msra.mxu0 0.0
    %702 = vmatprep.subr.mxu0 0.0
    %703 = vmatpush1.msra.mxu0 0.0
    %704 = vmatprep.subr.mxu0 0.0
    %705 = vmatpush1.msra.mxu0 0.0
    %706 = vmatprep.subr.mxu0 0.0
    %707 = vmatpush1.msra.mxu0 0.0
    %708 = vmatprep.subr.mxu0 0.0
    %709 = vmatpush1.msra.mxu0 0.0
    %710 = vmatprep.subr.mxu0 0.0
    %711 = vmatpush1.msra.mxu0 0.0
    %712 = vmatprep.subr.mxu0 0.0
    %713 = vmatpush1.msra.mxu0 0.0
    %714 = vmatprep.subr.mxu0 0.0
    %715 = vmatpush1.msra.mxu0 0.0
    %716 = vmatprep.subr.mxu0 0.0
    %717 = vmatpush1.msra.mxu0 0.0
    %718 = vmatprep.subr.mxu0 0.0
    %719 = vmatpush1.msra.mxu0 0.0
    %720 = vmatprep.subr.mxu0 0.0
    %721 = vmatpush1.msra.mxu0 0.0
    %722 = vmatprep.subr.mxu0 0.0
    %723 = vmatpush1.msra.mxu0 0.0
    %724 = vmatprep.subr.mxu0 0.0
    %725 = vmatpush1.msra.mxu0 0.0
    %726 = vmatprep.subr.mxu0 0.0
    %727 = vmatpush1.msra.mxu0 0.0
    %728 = vmatprep.subr.mxu0 0.0
    %729 = vmatpush1.msra.mxu0 0.0
    %730 = vmatprep.subr.mxu0 0.0
    %731 = vmatpush1.msra.mxu0 0.0
    %732 = vmatprep.subr.mxu0 0.0
    %733 = vmatpush1.msra.mxu0 0.0
    %734 = vmatprep.subr.mxu0 0.0
    %735 = vmatpush1.msra.mxu0 0.0
    %736 = vmatprep.mubr.f32.mxu0 0.0
    %737 = vmatmul.mubr.f32.gmra.mrb[0].mxu0 %v625
    %v738 = vpop.f32.mrb[0].mxu0
    %v739 = vadd.f32 0.0, %v738
    %v740 = vpop.f32.mrb[0].mxu0
    %741 = vmatprep.mubr.f32.mxu0 0.0
    %742 = vmatmul.mubr.f32.gmra.mrb[0].mxu0 %v628
    %v743 = vpop.f32.mrb[0].mxu0
    %v744 = vadd.f32 0.0, %v743
    %v745 = vpop.f32.mrb[0].mxu0
    %746 = vmatprep.mubr.f32.mxu0 0.0
    %747 = vmatmul.mubr.f32.gmra.mrb[0].mxu0 %v631
    %v748 = vpop.f32.mrb[0].mxu0
    %v749 = vadd.f32 0.0, %v748
    %v750 = vpop.f32.mrb[0].mxu0
    %751 = vmatprep.mubr.f32.mxu0 0.0
    %752 = vmatmul.mubr.f32.gmra.mrb[0].mxu0 %v634
    %v753 = vpop.f32.mrb[0].mxu0
    %v754 = vadd.f32 0.0, %v753
    %v755 = vpop.f32.mrb[0].mxu0
    %756 = vmatprep.mubr.f32.mxu0 0.0
    %757 = vmatmul.mubr.f32.gmra.mrb[0].mxu0 %v637
    %v758 = vpop.f32.mrb[0].mxu0
    %v759 = vadd.f32 0.0, %v758
    %v760 = vpop.f32.mrb[0].mxu0
    %761 = vmatprep.mubr.f32.mxu0 0.0
    %762 = vmatmul.mubr.f32.gmra.mrb[0].mxu0 %v640
    %v763 = vpop.f32.mrb[0].mxu0
    %v764 = vadd.f32 0.0, %v763
    %v765 = vpop.f32.mrb[0].mxu0
    %766 = vmatprep.mubr.f32.mxu0 0.0
    %767 = vmatmul.mubr.f32.gmra.mrb[0].mxu0 %v643
    %v768 = vpop.f32.mrb[0].mxu0
    %v769 = vadd.f32 0.0, %v768
    %v770 = vpop.f32.mrb[0].mxu0
    %771 = vmatprep.mubr.f32.mxu0 0.0
    %772 = vmatmul.mubr.f32.gmra.mrb[0].mxu0 %v646
    %v773 = vpop.f32.mrb[0].mxu0
    %v774 = vadd.f32 0.0, %v773
    %v775 = vpop.f32.mrb[0].mxu0
    %776 = vmatprep.mubr.f32.mxu0 0.0
    %777 = vmatmul.mubr.f32.gmra.mrb[0].mxu0 %v649
    %v778 = vpop.f32.mrb[0].mxu0
    %v779 = vadd.f32 0.0, %v778
    %v780 = vpop.f32.mrb[0].mxu0
    %781 = vmatprep.mubr.f32.mxu0 0.0
    %782 = vmatmul.mubr.f32.gmra.mrb[0].mxu0 %v652
    %v783 = vpop.f32.mrb[0].mxu0
    %v784 = vadd.f32 0.0, %v783
    %v785 = vpop.f32.mrb[0].mxu0
    %786 = vmatprep.mubr.f32.mxu0 0.0
    %787 = vmatmul.mubr.f32.gmra.mrb[0].mxu0 %v655
    %v788 = vpop.f32.mrb[0].mxu0
    %v789 = vadd.f32 0.0, %v788
    %v790 = vpop.f32.mrb[0].mxu0
    %791 = vmatprep.mubr.f32.mxu0 0.0
    %792 = vmatmul.mubr.f32.gmra.mrb[0].mxu0 %v658
    %v793 = vpop.f32.mrb[0].mxu0
    %v794 = vadd.f32 0.0, %v793
    %v795 = vpop.f32.mrb[0].mxu0
    %796 = vmatprep.mubr.f32.mxu0 0.0
    %797 = vmatmul.mubr.f32.gmra.mrb[0].mxu0 %v661
    %v798 = vpop.f32.mrb[0].mxu0
    %v799 = vadd.f32 0.0, %v798
    %v800 = vpop.f32.mrb[0].mxu0
    %801 = vmatprep.mubr.f32.mxu0 0.0
    %802 = vmatmul.mubr.f32.gmra.mrb[0].mxu0 %v664
    %v803 = vpop.f32.mrb[0].mxu0
    %v804 = vadd.f32 0.0, %v803
    %v805 = vpop.f32.mrb[0].mxu0
    %806 = vmatprep.mubr.f32.mxu0 0.0
    %807 = vmatmul.mubr.f32.gmra.mrb[0].mxu0 %v667
    %v808 = vpop.f32.mrb[0].mxu0
    %v809 = vadd.f32 0.0, %v808
    %v810 = vpop.f32.mrb[0].mxu0
    %811 = vmatprep.mubr.f32.mxu0 0.0
    %812 = vmatmul.mubr.f32.gmra.mrb[0].mxu0 %v670
    %v813 = vpop.f32.mrb[0].mxu0
    %v814 = vadd.f32 0.0, %v813
    %v815 = vpop.f32.mrb[0].mxu0
    %816 = vdwg.mxu0
    %v817 = vmul.f32 %v739, %v27
    %v818 = vmul.f32 %v744, %v28
    %v819 = vmul.f32 %v749, %v29
    %v820 = vmul.f32 %v754, %v30
    %v821 = vmul.f32 %v759, %v31
    %v822 = vmul.f32 %v764, %v32
    %v823 = vmul.f32 %v769, %v33
    %v824 = vmul.f32 %v774, %v34
    %v825 = vmul.f32 %v779, %v35
    %v826 = vmul.f32 %v784, %v36
    %v827 = vmul.f32 %v789, %v37
    %v828 = vmul.f32 %v794, %v38
    %v829 = vmul.f32 %v799, %v39
    %v830 = vmul.f32 %v804, %v40
    %v831 = vmul.f32 %v809, %v41
    %v832 = vmul.f32 %v814, %v42
    %v833 = vadd.f32 %v817, %v819
    %v834 = vadd.f32 %v818, %v820
    %v835 = vadd.f32 %v821, %v823
    %v836 = vadd.f32 %v822, %v824
    %v837 = vadd.f32 %v825, %v827
    %v838 = vadd.f32 %v826, %v828
    %v839 = vadd.f32 %v829, %v831
    %v840 = vadd.f32 %v830, %v832
    %v841 = vadd.f32 %v833, %v835
    %v842 = vadd.f32 %v834, %v836
    %v843 = vadd.f32 %v837, %v839
    %v844 = vadd.f32 %v838, %v840
    %v845 = vadd.f32 %v841, %v843
    %v846 = vadd.f32 %v842, %v844
    %v847 = vlaneseq
    %v848 = vshrl.u32 %v847, 7
    %v849 = vsub.s32 0, %v848
    %v850 = vrot.slane %v27, %v849
    %852 = vrot.lane.b32.xlu0 %v850, 64
    %v853 = vpop.permute.xlu0 %852
    %v856 = vsel %vm243, %v845, 0
    %v859 = vsel %vm243, %v846, 0
    %861 = vmatprep.subr.mxu0 0.0
    %862 = vmatpush1.msra.mxu0 %v153
    %863 = vmatprep.subr.mxu0 0.0
    %864 = vmatpush1.msra.mxu0 %v154
    %865 = vmatprep.subr.mxu0 0.0
    %866 = vmatpush1.msra.mxu0 %v155
    %867 = vmatprep.subr.mxu0 0.0
    %868 = vmatpush1.msra.mxu0 %v156
    %869 = vmatprep.subr.mxu0 0.0
    %870 = vmatpush1.msra.mxu0 0.0
    %871 = vmatprep.subr.mxu0 0.0
    %872 = vmatpush1.msra.mxu0 0.0
    %873 = vmatprep.subr.mxu0 0.0
    %874 = vmatpush1.msra.mxu0 0.0
    %875 = vmatprep.subr.mxu0 0.0
    %876 = vmatpush1.msra.mxu0 0.0
    %877 = vmatprep.subr.mxu0 0.0
    %878 = vmatpush1.msra.mxu0 0.0
    %879 = vmatprep.subr.mxu0 0.0
    %880 = vmatpush1.msra.mxu0 0.0
    %881 = vmatprep.subr.mxu0 0.0
    %882 = vmatpush1.msra.mxu0 0.0
    %883 = vmatprep.subr.mxu0 0.0
    %884 = vmatpush1.msra.mxu0 0.0
    %885 = vmatprep.subr.mxu0 0.0
    %886 = vmatpush1.msra.mxu0 0.0
    %887 = vmatprep.subr.mxu0 0.0
    %888 = vmatpush1.msra.mxu0 0.0
    %889 = vmatprep.subr.mxu0 0.0
    %890 = vmatpush1.msra.mxu0 0.0
    %891 = vmatprep.subr.mxu0 0.0
    %892 = vmatpush1.msra.mxu0 0.0
    %893 = vmatprep.subr.mxu0 0.0
    %894 = vmatpush1.msra.mxu0 0.0
    %895 = vmatprep.subr.mxu0 0.0
    %896 = vmatpush1.msra.mxu0 0.0
    %897 = vmatprep.subr.mxu0 0.0
    %898 = vmatpush1.msra.mxu0 0.0
    %899 = vmatprep.subr.mxu0 0.0
    %900 = vmatpush1.msra.mxu0 0.0
    %901 = vmatprep.subr.mxu0 0.0
    %902 = vmatpush1.msra.mxu0 0.0
    %903 = vmatprep.subr.mxu0 0.0
    %904 = vmatpush1.msra.mxu0 0.0
    %905 = vmatprep.subr.mxu0 0.0
    %906 = vmatpush1.msra.mxu0 0.0
    %907 = vmatprep.subr.mxu0 0.0
    %908 = vmatpush1.msra.mxu0 0.0
    %909 = vmatprep.subr.mxu0 0.0
    %910 = vmatpush1.msra.mxu0 0.0
    %911 = vmatprep.subr.mxu0 0.0
    %912 = vmatpush1.msra.mxu0 0.0
    %913 = vmatprep.subr.mxu0 0.0
    %914 = vmatpush1.msra.mxu0 0.0
    %915 = vmatprep.subr.mxu0 0.0
    %916 = vmatpush1.msra.mxu0 0.0
    %917 = vmatprep.subr.mxu0 0.0
    %918 = vmatpush1.msra.mxu0 0.0
    %919 = vmatprep.subr.mxu0 0.0
    %920 = vmatpush1.msra.mxu0 0.0
    %921 = vmatprep.subr.mxu0 0.0
    %922 = vmatpush1.msra.mxu0 0.0
    %923 = vmatprep.subr.mxu0 0.0
    %924 = vmatpush1.msra.mxu0 0.0
    %925 = vmatprep.mubr.f32.mxu0 0.0
    %926 = vmatmul.mubr.f32.gmra.mrb[0].mxu0 %v856
    %v927 = vpop.f32.mrb[0].mxu0
    %v928 = vadd.f32 %v853, %v927
    %v929 = vpop.f32.mrb[0].mxu0
    %930 = vmatprep.mubr.f32.mxu0 0.0
    %931 = vmatmul.mubr.f32.gmra.mrb[0].mxu0 %v859
    %v932 = vpop.f32.mrb[0].mxu0
    %v933 = vadd.f32 %v853, %v932
    %v934 = vpop.f32.mrb[0].mxu0
    %935 = vdwg.mxu0
    %v936 = vadd.f32 %v928, %v43
    %v937 = vadd.f32 %v933, %v44
    %v938 = vsel %vm243, %v936, 0.0
    %939 = vadd.xlane.f32.xlu0 %v938
    %v940 = vpop.xlane.xlu0 %939
    %v941 = vsel %vm243, %v937, 0.0
    %942 = vadd.xlane.f32.xlu0 %v941
    %v943 = vpop.xlane.xlu0 %942
    %v944 = vrcp.pop 32.0
    %v945 = vmul.f32 %v940, %v944
    %v946 = vmul.f32 %v943, %v944
    %v947 = vsub.f32 %v936, %v945
    %v948 = vsub.f32 %v937, %v946
    %v949 = vmul.f32 %v947, %v947
    %v950 = vmul.f32 %v948, %v948
    %v951 = vsel %vm243, %v949, 0.0
    %952 = vadd.xlane.f32.xlu0 %v951
    %v953 = vpop.xlane.xlu0 %952
    %v954 = vsel %vm243, %v950, 0.0
    %955 = vadd.xlane.f32.xlu0 %v954
    %v956 = vpop.xlane.xlu0 %955
    %v957 = vmul.f32 %v953, %v944
    %v958 = vmul.f32 %v956, %v944
    %v959 = vadd.f32 %v957, 1e-05
    %v960 = vadd.f32 %v958, 1e-05
    %v961 = vrsqrt.pop %v959
    %v962 = vrsqrt.pop %v960
    %v963 = vmul.f32 %v947, %v961
    %v964 = vmul.f32 %v948, %v962
    %v965 = vlaneseq
    %v966 = vshrl.u32 %v965, 7
    %v967 = vsub.s32 2, %v966
    %v968 = vrot.slane %v27, %v967
    %970 = vrot.lane.b32.xlu0 %v968, 64
    %v971 = vpop.permute.xlu0 %970
    %v973 = vmul.f32 %v963, %v971
    %v974 = vmul.f32 %v964, %v971
    %v975 = vlaneseq
    %v976 = vshrl.u32 %v975, 7
    %v977 = vsub.s32 3, %v976
    %v978 = vrot.slane %v27, %v977
    %980 = vrot.lane.b32.xlu0 %v978, 64
    %v981 = vpop.permute.xlu0 %980
    %v983 = vadd.f32 %v973, %v981
    %v984 = vadd.f32 %v974, %v981
    %s985 = scalar_lea.vmem %s2, 64
    %v986 = vld [vmem:[%s985] sm:$0xff]
    %v987 = vld [vmem:[%s985 + $0x8] sm:$0xff]
    %v988 = vld [vmem:[%s985 + $0x10] sm:$0xff]
    %v989 = vld [vmem:[%s985 + $0x18] sm:$0xff]
    %v991 = vsel %vm243, %v983, 0
    %v994 = vsel %vm243, %v984, 0
    %996 = vmatprep.subr.mxu0 0.0
    %997 = vmatpush1.msra.mxu0 %v986
    %998 = vmatprep.subr.mxu0 0.0
    %999 = vmatpush1.msra.mxu0 %v987
    %1000 = vmatprep.subr.mxu0 0.0
    %1001 = vmatpush1.msra.mxu0 %v988
    %1002 = vmatprep.subr.mxu0 0.0
    %1003 = vmatpush1.msra.mxu0 %v989
    %1004 = vmatprep.subr.mxu0 0.0
    %1005 = vmatpush1.msra.mxu0 0.0
    %1006 = vmatprep.subr.mxu0 0.0
    %1007 = vmatpush1.msra.mxu0 0.0
    %1008 = vmatprep.subr.mxu0 0.0
    %1009 = vmatpush1.msra.mxu0 0.0
    %1010 = vmatprep.subr.mxu0 0.0
    %1011 = vmatpush1.msra.mxu0 0.0
    %1012 = vmatprep.subr.mxu0 0.0
    %1013 = vmatpush1.msra.mxu0 0.0
    %1014 = vmatprep.subr.mxu0 0.0
    %1015 = vmatpush1.msra.mxu0 0.0
    %1016 = vmatprep.subr.mxu0 0.0
    %1017 = vmatpush1.msra.mxu0 0.0
    %1018 = vmatprep.subr.mxu0 0.0
    %1019 = vmatpush1.msra.mxu0 0.0
    %1020 = vmatprep.subr.mxu0 0.0
    %1021 = vmatpush1.msra.mxu0 0.0
    %1022 = vmatprep.subr.mxu0 0.0
    %1023 = vmatpush1.msra.mxu0 0.0
    %1024 = vmatprep.subr.mxu0 0.0
    %1025 = vmatpush1.msra.mxu0 0.0
    %1026 = vmatprep.subr.mxu0 0.0
    %1027 = vmatpush1.msra.mxu0 0.0
    %1028 = vmatprep.subr.mxu0 0.0
    %1029 = vmatpush1.msra.mxu0 0.0
    %1030 = vmatprep.subr.mxu0 0.0
    %1031 = vmatpush1.msra.mxu0 0.0
    %1032 = vmatprep.subr.mxu0 0.0
    %1033 = vmatpush1.msra.mxu0 0.0
    %1034 = vmatprep.subr.mxu0 0.0
    %1035 = vmatpush1.msra.mxu0 0.0
    %1036 = vmatprep.subr.mxu0 0.0
    %1037 = vmatpush1.msra.mxu0 0.0
    %1038 = vmatprep.subr.mxu0 0.0
    %1039 = vmatpush1.msra.mxu0 0.0
    %1040 = vmatprep.subr.mxu0 0.0
    %1041 = vmatpush1.msra.mxu0 0.0
    %1042 = vmatprep.subr.mxu0 0.0
    %1043 = vmatpush1.msra.mxu0 0.0
    %1044 = vmatprep.subr.mxu0 0.0
    %1045 = vmatpush1.msra.mxu0 0.0
    %1046 = vmatprep.subr.mxu0 0.0
    %1047 = vmatpush1.msra.mxu0 0.0
    %1048 = vmatprep.subr.mxu0 0.0
    %1049 = vmatpush1.msra.mxu0 0.0
    %1050 = vmatprep.subr.mxu0 0.0
    %1051 = vmatpush1.msra.mxu0 0.0
    %1052 = vmatprep.subr.mxu0 0.0
    %1053 = vmatpush1.msra.mxu0 0.0
    %1054 = vmatprep.subr.mxu0 0.0
    %1055 = vmatpush1.msra.mxu0 0.0
    %1056 = vmatprep.subr.mxu0 0.0
    %1057 = vmatpush1.msra.mxu0 0.0
    %1058 = vmatprep.subr.mxu0 0.0
    %1059 = vmatpush1.msra.mxu0 0.0
    %1060 = vmatprep.mubr.f32.mxu0 0.0
    %1061 = vmatmul.mubr.f32.gmra.mrb[0].mxu0 %v991
    %v1062 = vpop.f32.mrb[0].mxu0
    %v1063 = vadd.f32 0.0, %v1062
    %v1064 = vpop.f32.mrb[0].mxu0
    %1065 = vmatprep.mubr.f32.mxu0 0.0
    %1066 = vmatmul.mubr.f32.gmra.mrb[0].mxu0 %v994
    %v1067 = vpop.f32.mrb[0].mxu0
    %v1068 = vadd.f32 0.0, %v1067
    %v1069 = vpop.f32.mrb[0].mxu0
    %1070 = vdwg.mxu0
    %s1071 = scalar_lea.vmem %s2, 32
    %v1072 = vld [vmem:[%s1071] sm:$0xff]
    %v1073 = vld [vmem:[%s1071 + $0x8] sm:$0xff]
    %v1074 = vld [vmem:[%s1071 + $0x10] sm:$0xff]
    %v1075 = vld [vmem:[%s1071 + $0x18] sm:$0xff]
    %v1076 = vmul.f32 %v143, %v196
    %v1077 = vmul.f32 %v149, %v198
    %v1078 = vmul.f32 %v143, %v200
    %v1079 = vmul.f32 %v149, %v202
    %v1080 = vmul.f32 %v143, %v204
    %v1081 = vmul.f32 %v149, %v206
    %v1082 = vmul.f32 %v143, %v208
    %v1083 = vmul.f32 %v149, %v210
    %v1084 = vmul.f32 %v143, %v212
    %v1085 = vmul.f32 %v149, %v214
    %v1086 = vmul.f32 %v143, %v216
    %v1087 = vmul.f32 %v149, %v218
    %v1088 = vmul.f32 %v143, %v220
    %v1089 = vmul.f32 %v149, %v222
    %v1090 = vmul.f32 %v143, %v224
    %v1091 = vmul.f32 %v149, %v226
    %1108 = vrot.lane.b32.xlu0 %v1076, 32
    %v1109 = vpop.permute.xlu0 %1108
    %1110 = vrot.lane.b32.xlu0 %v1077, 32
    %v1111 = vpop.permute.xlu0 %1110
    %1112 = vrot.lane.b32.xlu0 %v1078, 32
    %v1113 = vpop.permute.xlu0 %1112
    %1114 = vrot.lane.b32.xlu0 %v1079, 32
    %v1115 = vpop.permute.xlu0 %1114
    %1116 = vrot.lane.b32.xlu0 %v1080, 32
    %v1117 = vpop.permute.xlu0 %1116
    %1118 = vrot.lane.b32.xlu0 %v1081, 32
    %v1119 = vpop.permute.xlu0 %1118
    %1120 = vrot.lane.b32.xlu0 %v1082, 32
    %v1121 = vpop.permute.xlu0 %1120
    %1122 = vrot.lane.b32.xlu0 %v1083, 32
    %v1123 = vpop.permute.xlu0 %1122
    %1124 = vrot.lane.b32.xlu0 %v1084, 32
    %v1125 = vpop.permute.xlu0 %1124
    %1126 = vrot.lane.b32.xlu0 %v1085, 32
    %v1127 = vpop.permute.xlu0 %1126
    %1128 = vrot.lane.b32.xlu0 %v1086, 32
    %v1129 = vpop.permute.xlu0 %1128
    %1130 = vrot.lane.b32.xlu0 %v1087, 32
    %v1131 = vpop.permute.xlu0 %1130
    %1132 = vrot.lane.b32.xlu0 %v1088, 32
    %v1133 = vpop.permute.xlu0 %1132
    %1134 = vrot.lane.b32.xlu0 %v1089, 32
    %v1135 = vpop.permute.xlu0 %1134
    %1136 = vrot.lane.b32.xlu0 %v1090, 32
    %v1137 = vpop.permute.xlu0 %1136
    %1138 = vrot.lane.b32.xlu0 %v1091, 32
    %v1139 = vpop.permute.xlu0 %1138
    %1140 = vrot.lane.b32.xlu0 %v27, 80
    %v1141 = vpop.permute.xlu0 %1140
    %1142 = vrot.lane.b32.xlu0 %v28, 80
    %v1143 = vpop.permute.xlu0 %1142
    %1144 = vrot.lane.b32.xlu0 %v29, 80
    %v1145 = vpop.permute.xlu0 %1144
    %1146 = vrot.lane.b32.xlu0 %v30, 80
    %v1147 = vpop.permute.xlu0 %1146
    %1148 = vrot.lane.b32.xlu0 %v31, 80
    %v1149 = vpop.permute.xlu0 %1148
    %1150 = vrot.lane.b32.xlu0 %v32, 80
    %v1151 = vpop.permute.xlu0 %1150
    %1152 = vrot.lane.b32.xlu0 %v33, 80
    %v1153 = vpop.permute.xlu0 %1152
    %1154 = vrot.lane.b32.xlu0 %v34, 80
    %v1155 = vpop.permute.xlu0 %1154
    %1156 = vrot.lane.b32.xlu0 %v35, 80
    %v1157 = vpop.permute.xlu0 %1156
    %1158 = vrot.lane.b32.xlu0 %v36, 80
    %v1159 = vpop.permute.xlu0 %1158
    %1160 = vrot.lane.b32.xlu0 %v37, 80
    %v1161 = vpop.permute.xlu0 %1160
    %1162 = vrot.lane.b32.xlu0 %v38, 80
    %v1163 = vpop.permute.xlu0 %1162
    %1164 = vrot.lane.b32.xlu0 %v39, 80
    %v1165 = vpop.permute.xlu0 %1164
    %1166 = vrot.lane.b32.xlu0 %v40, 80
    %v1167 = vpop.permute.xlu0 %1166
    %1168 = vrot.lane.b32.xlu0 %v41, 80
    %v1169 = vpop.permute.xlu0 %1168
    %1170 = vrot.lane.b32.xlu0 %v42, 80
    %v1171 = vpop.permute.xlu0 %1170
    %v1188 = vsel %vm243, %v1109, 0
    %v1190 = vsel %vm243, %v1111, 0
    %v1192 = vsel %vm243, %v1113, 0
    %v1194 = vsel %vm243, %v1115, 0
    %v1196 = vsel %vm243, %v1117, 0
    %v1198 = vsel %vm243, %v1119, 0
    %v1200 = vsel %vm243, %v1121, 0
    %v1202 = vsel %vm243, %v1123, 0
    %v1204 = vsel %vm243, %v1125, 0
    %v1206 = vsel %vm243, %v1127, 0
    %v1208 = vsel %vm243, %v1129, 0
    %v1210 = vsel %vm243, %v1131, 0
    %v1212 = vsel %vm243, %v1133, 0
    %v1214 = vsel %vm243, %v1135, 0
    %v1216 = vsel %vm243, %v1137, 0
    %v1218 = vsel %vm243, %v1139, 0
    %v1221 = vsel %vm243, %v145, 0
    %v1224 = vsel %vm243, %v151, 0
    %1226 = vmatprep.subr.mxu0 0.0
    %1227 = vmatpush1.xpose.msra.mxu0 %v1221
    %1228 = vmatprep.subr.mxu0 0.0
    %1229 = vmatpush1.xpose.msra.mxu0 %v1224
    %1230 = vmatprep.subr.mxu0 0.0
    %1231 = vmatpush1.xpose.msra.mxu0 0.0
    %1232 = vmatprep.subr.mxu0 0.0
    %1233 = vmatpush1.xpose.msra.mxu0 0.0
    %1234 = vmatprep.subr.mxu0 0.0
    %1235 = vmatpush1.xpose.msra.mxu0 0.0
    %1236 = vmatprep.subr.mxu0 0.0
    %1237 = vmatpush1.xpose.msra.mxu0 0.0
    %1238 = vmatprep.subr.mxu0 0.0
    %1239 = vmatpush1.xpose.msra.mxu0 0.0
    %1240 = vmatprep.subr.mxu0 0.0
    %1241 = vmatpush1.xpose.msra.mxu0 0.0
    %1242 = vmatprep.subr.mxu0 0.0
    %1243 = vmatpush1.xpose.msra.mxu0 0.0
    %1244 = vmatprep.subr.mxu0 0.0
    %1245 = vmatpush1.xpose.msra.mxu0 0.0
    %1246 = vmatprep.subr.mxu0 0.0
    %1247 = vmatpush1.xpose.msra.mxu0 0.0
    %1248 = vmatprep.subr.mxu0 0.0
    %1249 = vmatpush1.xpose.msra.mxu0 0.0
    %1250 = vmatprep.subr.mxu0 0.0
    %1251 = vmatpush1.xpose.msra.mxu0 0.0
    %1252 = vmatprep.subr.mxu0 0.0
    %1253 = vmatpush1.xpose.msra.mxu0 0.0
    %1254 = vmatprep.subr.mxu0 0.0
    %1255 = vmatpush1.xpose.msra.mxu0 0.0
    %1256 = vmatprep.subr.mxu0 0.0
    %1257 = vmatpush1.xpose.msra.mxu0 0.0
    %1258 = vmatprep.subr.mxu0 0.0
    %1259 = vmatpush1.xpose.msra.mxu0 0.0
    %1260 = vmatprep.subr.mxu0 0.0
    %1261 = vmatpush1.xpose.msra.mxu0 0.0
    %1262 = vmatprep.subr.mxu0 0.0
    %1263 = vmatpush1.xpose.msra.mxu0 0.0
    %1264 = vmatprep.subr.mxu0 0.0
    %1265 = vmatpush1.xpose.msra.mxu0 0.0
    %1266 = vmatprep.subr.mxu0 0.0
    %1267 = vmatpush1.xpose.msra.mxu0 0.0
    %1268 = vmatprep.subr.mxu0 0.0
    %1269 = vmatpush1.xpose.msra.mxu0 0.0
    %1270 = vmatprep.subr.mxu0 0.0
    %1271 = vmatpush1.xpose.msra.mxu0 0.0
    %1272 = vmatprep.subr.mxu0 0.0
    %1273 = vmatpush1.xpose.msra.mxu0 0.0
    %1274 = vmatprep.subr.mxu0 0.0
    %1275 = vmatpush1.xpose.msra.mxu0 0.0
    %1276 = vmatprep.subr.mxu0 0.0
    %1277 = vmatpush1.xpose.msra.mxu0 0.0
    %1278 = vmatprep.subr.mxu0 0.0
    %1279 = vmatpush1.xpose.msra.mxu0 0.0
    %1280 = vmatprep.subr.mxu0 0.0
    %1281 = vmatpush1.xpose.msra.mxu0 0.0
    %1282 = vmatprep.subr.mxu0 0.0
    %1283 = vmatpush1.xpose.msra.mxu0 0.0
    %1284 = vmatprep.subr.mxu0 0.0
    %1285 = vmatpush1.xpose.msra.mxu0 0.0
    %1286 = vmatprep.subr.mxu0 0.0
    %1287 = vmatpush1.xpose.msra.mxu0 0.0
    %1288 = vmatprep.subr.mxu0 0.0
    %1289 = vmatpush1.xpose.msra.mxu0 0.0
    %1290 = vmatprep.mubr.f32.mxu0 0.0
    %1291 = vmatmul.mubr.f32.gmra.mrb[0].mxu0 %v1188
    %v1292 = vpop.f32.mrb[0].mxu0
    %v1293 = vadd.f32 %v1141, %v1292
    %v1294 = vpop.f32.mrb[0].mxu0
    %1295 = vmatprep.mubr.f32.mxu0 0.0
    %1296 = vmatmul.mubr.f32.gmra.mrb[0].mxu0 %v1190
    %v1297 = vpop.f32.mrb[0].mxu0
    %v1298 = vadd.f32 %v1143, %v1297
    %v1299 = vpop.f32.mrb[0].mxu0
    %1300 = vmatprep.mubr.f32.mxu0 0.0
    %1301 = vmatmul.mubr.f32.gmra.mrb[0].mxu0 %v1192
    %v1302 = vpop.f32.mrb[0].mxu0
    %v1303 = vadd.f32 %v1145, %v1302
    %v1304 = vpop.f32.mrb[0].mxu0
    %1305 = vmatprep.mubr.f32.mxu0 0.0
    %1306 = vmatmul.mubr.f32.gmra.mrb[0].mxu0 %v1194
    %v1307 = vpop.f32.mrb[0].mxu0
    %v1308 = vadd.f32 %v1147, %v1307
    %v1309 = vpop.f32.mrb[0].mxu0
    %1310 = vmatprep.mubr.f32.mxu0 0.0
    %1311 = vmatmul.mubr.f32.gmra.mrb[0].mxu0 %v1196
    %v1312 = vpop.f32.mrb[0].mxu0
    %v1313 = vadd.f32 %v1149, %v1312
    %v1314 = vpop.f32.mrb[0].mxu0
    %1315 = vmatprep.mubr.f32.mxu0 0.0
    %1316 = vmatmul.mubr.f32.gmra.mrb[0].mxu0 %v1198
    %v1317 = vpop.f32.mrb[0].mxu0
    %v1318 = vadd.f32 %v1151, %v1317
    %v1319 = vpop.f32.mrb[0].mxu0
    %1320 = vmatprep.mubr.f32.mxu0 0.0
    %1321 = vmatmul.mubr.f32.gmra.mrb[0].mxu0 %v1200
    %v1322 = vpop.f32.mrb[0].mxu0
    %v1323 = vadd.f32 %v1153, %v1322
    %v1324 = vpop.f32.mrb[0].mxu0
    %1325 = vmatprep.mubr.f32.mxu0 0.0
    %1326 = vmatmul.mubr.f32.gmra.mrb[0].mxu0 %v1202
    %v1327 = vpop.f32.mrb[0].mxu0
    %v1328 = vadd.f32 %v1155, %v1327
    %v1329 = vpop.f32.mrb[0].mxu0
    %1330 = vmatprep.mubr.f32.mxu0 0.0
    %1331 = vmatmul.mubr.f32.gmra.mrb[0].mxu0 %v1204
    %v1332 = vpop.f32.mrb[0].mxu0
    %v1333 = vadd.f32 %v1157, %v1332
    %v1334 = vpop.f32.mrb[0].mxu0
    %1335 = vmatprep.mubr.f32.mxu0 0.0
    %1336 = vmatmul.mubr.f32.gmra.mrb[0].mxu0 %v1206
    %v1337 = vpop.f32.mrb[0].mxu0
    %v1338 = vadd.f32 %v1159, %v1337
    %v1339 = vpop.f32.mrb[0].mxu0
    %1340 = vmatprep.mubr.f32.mxu0 0.0
    %1341 = vmatmul.mubr.f32.gmra.mrb[0].mxu0 %v1208
    %v1342 = vpop.f32.mrb[0].mxu0
    %v1343 = vadd.f32 %v1161, %v1342
    %v1344 = vpop.f32.mrb[0].mxu0
    %1345 = vmatprep.mubr.f32.mxu0 0.0
    %1346 = vmatmul.mubr.f32.gmra.mrb[0].mxu0 %v1210
    %v1347 = vpop.f32.mrb[0].mxu0
    %v1348 = vadd.f32 %v1163, %v1347
    %v1349 = vpop.f32.mrb[0].mxu0
    %1350 = vmatprep.mubr.f32.mxu0 0.0
    %1351 = vmatmul.mubr.f32.gmra.mrb[0].mxu0 %v1212
    %v1352 = vpop.f32.mrb[0].mxu0
    %v1353 = vadd.f32 %v1165, %v1352
    %v1354 = vpop.f32.mrb[0].mxu0
    %1355 = vmatprep.mubr.f32.mxu0 0.0
    %1356 = vmatmul.mubr.f32.gmra.mrb[0].mxu0 %v1214
    %v1357 = vpop.f32.mrb[0].mxu0
    %v1358 = vadd.f32 %v1167, %v1357
    %v1359 = vpop.f32.mrb[0].mxu0
    %1360 = vmatprep.mubr.f32.mxu0 0.0
    %1361 = vmatmul.mubr.f32.gmra.mrb[0].mxu0 %v1216
    %v1362 = vpop.f32.mrb[0].mxu0
    %v1363 = vadd.f32 %v1169, %v1362
    %v1364 = vpop.f32.mrb[0].mxu0
    %1365 = vmatprep.mubr.f32.mxu0 0.0
    %1366 = vmatmul.mubr.f32.gmra.mrb[0].mxu0 %v1218
    %v1367 = vpop.f32.mrb[0].mxu0
    %v1368 = vadd.f32 %v1171, %v1367
    %v1369 = vpop.f32.mrb[0].mxu0
    %1370 = vdwg.mxu0
    %v1371 = vsel %vm441, %v1293, -inf
    %1372 = vmax.xlane.f32.xlu0 %v1371
    %v1373 = vpop.xlane.xlu0 %1372
    %v1374 = vsel %vm441, %v1298, -inf
    %1375 = vmax.xlane.f32.xlu0 %v1374
    %v1376 = vpop.xlane.xlu0 %1375
    %v1377 = vsel %vm441, %v1303, -inf
    %1378 = vmax.xlane.f32.xlu0 %v1377
    %v1379 = vpop.xlane.xlu0 %1378
    %v1380 = vsel %vm441, %v1308, -inf
    %1381 = vmax.xlane.f32.xlu0 %v1380
    %v1382 = vpop.xlane.xlu0 %1381
    %v1383 = vsel %vm441, %v1313, -inf
    %1384 = vmax.xlane.f32.xlu0 %v1383
    %v1385 = vpop.xlane.xlu0 %1384
    %v1386 = vsel %vm441, %v1318, -inf
    %1387 = vmax.xlane.f32.xlu0 %v1386
    %v1388 = vpop.xlane.xlu0 %1387
    %v1389 = vsel %vm441, %v1323, -inf
    %1390 = vmax.xlane.f32.xlu0 %v1389
    %v1391 = vpop.xlane.xlu0 %1390
    %v1392 = vsel %vm441, %v1328, -inf
    %1393 = vmax.xlane.f32.xlu0 %v1392
    %v1394 = vpop.xlane.xlu0 %1393
    %v1395 = vsel %vm441, %v1333, -inf
    %1396 = vmax.xlane.f32.xlu0 %v1395
    %v1397 = vpop.xlane.xlu0 %1396
    %v1398 = vsel %vm441, %v1338, -inf
    %1399 = vmax.xlane.f32.xlu0 %v1398
    %v1400 = vpop.xlane.xlu0 %1399
    %v1401 = vsel %vm441, %v1343, -inf
    %1402 = vmax.xlane.f32.xlu0 %v1401
    %v1403 = vpop.xlane.xlu0 %1402
    %v1404 = vsel %vm441, %v1348, -inf
    %1405 = vmax.xlane.f32.xlu0 %v1404
    %v1406 = vpop.xlane.xlu0 %1405
    %v1407 = vsel %vm441, %v1353, -inf
    %1408 = vmax.xlane.f32.xlu0 %v1407
    %v1409 = vpop.xlane.xlu0 %1408
    %v1410 = vsel %vm441, %v1358, -inf
    %1411 = vmax.xlane.f32.xlu0 %v1410
    %v1412 = vpop.xlane.xlu0 %1411
    %v1413 = vsel %vm441, %v1363, -inf
    %1414 = vmax.xlane.f32.xlu0 %v1413
    %v1415 = vpop.xlane.xlu0 %1414
    %v1416 = vsel %vm441, %v1368, -inf
    %1417 = vmax.xlane.f32.xlu0 %v1416
    %v1418 = vpop.xlane.xlu0 %1417
    %v1419 = vsub.f32 %v1293, %v1373
    %v1420 = vsub.f32 %v1298, %v1376
    %v1421 = vsub.f32 %v1303, %v1379
    %v1422 = vsub.f32 %v1308, %v1382
    %v1423 = vsub.f32 %v1313, %v1385
    %v1424 = vsub.f32 %v1318, %v1388
    %v1425 = vsub.f32 %v1323, %v1391
    %v1426 = vsub.f32 %v1328, %v1394
    %v1427 = vsub.f32 %v1333, %v1397
    %v1428 = vsub.f32 %v1338, %v1400
    %v1429 = vsub.f32 %v1343, %v1403
    %v1430 = vsub.f32 %v1348, %v1406
    %v1431 = vsub.f32 %v1353, %v1409
    %v1432 = vsub.f32 %v1358, %v1412
    %v1433 = vsub.f32 %v1363, %v1415
    %v1434 = vsub.f32 %v1368, %v1418
    %v1435 = vmul.f32 %v1419, 1.442695
    %v1436 = vpow.pop %v1435
    %v1437 = vmul.f32 %v1420, 1.442695
    %v1438 = vpow.pop %v1437
    %v1439 = vmul.f32 %v1421, 1.442695
    %v1440 = vpow.pop %v1439
    %v1441 = vmul.f32 %v1422, 1.442695
    %v1442 = vpow.pop %v1441
    %v1443 = vmul.f32 %v1423, 1.442695
    %v1444 = vpow.pop %v1443
    %v1445 = vmul.f32 %v1424, 1.442695
    %v1446 = vpow.pop %v1445
    %v1447 = vmul.f32 %v1425, 1.442695
    %v1448 = vpow.pop %v1447
    %v1449 = vmul.f32 %v1426, 1.442695
    %v1450 = vpow.pop %v1449
    %v1451 = vmul.f32 %v1427, 1.442695
    %v1452 = vpow.pop %v1451
    %v1453 = vmul.f32 %v1428, 1.442695
    %v1454 = vpow.pop %v1453
    %v1455 = vmul.f32 %v1429, 1.442695
    %v1456 = vpow.pop %v1455
    %v1457 = vmul.f32 %v1430, 1.442695
    %v1458 = vpow.pop %v1457
    %v1459 = vmul.f32 %v1431, 1.442695
    %v1460 = vpow.pop %v1459
    %v1461 = vmul.f32 %v1432, 1.442695
    %v1462 = vpow.pop %v1461
    %v1463 = vmul.f32 %v1433, 1.442695
    %v1464 = vpow.pop %v1463
    %v1465 = vmul.f32 %v1434, 1.442695
    %v1466 = vpow.pop %v1465
    %v1467 = vsel %vm441, %v1436, 0.0
    %1468 = vadd.xlane.f32.xlu0 %v1467
    %v1469 = vpop.xlane.xlu0 %1468
    %v1470 = vsel %vm441, %v1438, 0.0
    %1471 = vadd.xlane.f32.xlu0 %v1470
    %v1472 = vpop.xlane.xlu0 %1471
    %v1473 = vsel %vm441, %v1440, 0.0
    %1474 = vadd.xlane.f32.xlu0 %v1473
    %v1475 = vpop.xlane.xlu0 %1474
    %v1476 = vsel %vm441, %v1442, 0.0
    %1477 = vadd.xlane.f32.xlu0 %v1476
    %v1478 = vpop.xlane.xlu0 %1477
    %v1479 = vsel %vm441, %v1444, 0.0
    %1480 = vadd.xlane.f32.xlu0 %v1479
    %v1481 = vpop.xlane.xlu0 %1480
    %v1482 = vsel %vm441, %v1446, 0.0
    %1483 = vadd.xlane.f32.xlu0 %v1482
    %v1484 = vpop.xlane.xlu0 %1483
    %v1485 = vsel %vm441, %v1448, 0.0
    %1486 = vadd.xlane.f32.xlu0 %v1485
    %v1487 = vpop.xlane.xlu0 %1486
    %v1488 = vsel %vm441, %v1450, 0.0
    %1489 = vadd.xlane.f32.xlu0 %v1488
    %v1490 = vpop.xlane.xlu0 %1489
    %v1491 = vsel %vm441, %v1452, 0.0
    %1492 = vadd.xlane.f32.xlu0 %v1491
    %v1493 = vpop.xlane.xlu0 %1492
    %v1494 = vsel %vm441, %v1454, 0.0
    %1495 = vadd.xlane.f32.xlu0 %v1494
    %v1496 = vpop.xlane.xlu0 %1495
    %v1497 = vsel %vm441, %v1456, 0.0
    %1498 = vadd.xlane.f32.xlu0 %v1497
    %v1499 = vpop.xlane.xlu0 %1498
    %v1500 = vsel %vm441, %v1458, 0.0
    %1501 = vadd.xlane.f32.xlu0 %v1500
    %v1502 = vpop.xlane.xlu0 %1501
    %v1503 = vsel %vm441, %v1460, 0.0
    %1504 = vadd.xlane.f32.xlu0 %v1503
    %v1505 = vpop.xlane.xlu0 %1504
    %v1506 = vsel %vm441, %v1462, 0.0
    %1507 = vadd.xlane.f32.xlu0 %v1506
    %v1508 = vpop.xlane.xlu0 %1507
    %v1509 = vsel %vm441, %v1464, 0.0
    %1510 = vadd.xlane.f32.xlu0 %v1509
    %v1511 = vpop.xlane.xlu0 %1510
    %v1512 = vsel %vm441, %v1466, 0.0
    %1513 = vadd.xlane.f32.xlu0 %v1512
    %v1514 = vpop.xlane.xlu0 %1513
    %v1515 = vrcp.pop %v1469
    %v1516 = vrcp.pop %v1472
    %v1517 = vrcp.pop %v1475
    %v1518 = vrcp.pop %v1478
    %v1519 = vrcp.pop %v1481
    %v1520 = vrcp.pop %v1484
    %v1521 = vrcp.pop %v1487
    %v1522 = vrcp.pop %v1490
    %v1523 = vrcp.pop %v1493
    %v1524 = vrcp.pop %v1496
    %v1525 = vrcp.pop %v1499
    %v1526 = vrcp.pop %v1502
    %v1527 = vrcp.pop %v1505
    %v1528 = vrcp.pop %v1508
    %v1529 = vrcp.pop %v1511
    %v1530 = vrcp.pop %v1514
    %v1531 = vmul.f32 %v1436, %v1515
    %v1532 = vmul.f32 %v1438, %v1516
    %v1533 = vmul.f32 %v1440, %v1517
    %v1534 = vmul.f32 %v1442, %v1518
    %v1535 = vmul.f32 %v1444, %v1519
    %v1536 = vmul.f32 %v1446, %v1520
    %v1537 = vmul.f32 %v1448, %v1521
    %v1538 = vmul.f32 %v1450, %v1522
    %v1539 = vmul.f32 %v1452, %v1523
    %v1540 = vmul.f32 %v1454, %v1524
    %v1541 = vmul.f32 %v1456, %v1525
    %v1542 = vmul.f32 %v1458, %v1526
    %v1543 = vmul.f32 %v1460, %v1527
    %v1544 = vmul.f32 %v1462, %v1528
    %v1545 = vmul.f32 %v1464, %v1529
    %v1546 = vmul.f32 %v1466, %v1530
    %v1548 = vsel %vm441, %v1531, 0
    %v1551 = vsel %vm441, %v1532, 0
    %v1554 = vsel %vm441, %v1533, 0
    %v1557 = vsel %vm441, %v1534, 0
    %v1560 = vsel %vm441, %v1535, 0
    %v1563 = vsel %vm441, %v1536, 0
    %v1566 = vsel %vm441, %v1537, 0
    %v1569 = vsel %vm441, %v1538, 0
    %v1572 = vsel %vm441, %v1539, 0
    %v1575 = vsel %vm441, %v1540, 0
    %v1578 = vsel %vm441, %v1541, 0
    %v1581 = vsel %vm441, %v1542, 0
    %v1584 = vsel %vm441, %v1543, 0
    %v1587 = vsel %vm441, %v1544, 0
    %v1590 = vsel %vm441, %v1545, 0
    %v1593 = vsel %vm441, %v1546, 0
    %1595 = vmatprep.subr.mxu0 0.0
    %1596 = vmatpush1.msra.mxu0 %v1063
    %1597 = vmatprep.subr.mxu0 0.0
    %1598 = vmatpush1.msra.mxu0 %v1068
    %1599 = vmatprep.subr.mxu0 0.0
    %1600 = vmatpush1.msra.mxu0 0.0
    %1601 = vmatprep.subr.mxu0 0.0
    %1602 = vmatpush1.msra.mxu0 0.0
    %1603 = vmatprep.subr.mxu0 0.0
    %1604 = vmatpush1.msra.mxu0 0.0
    %1605 = vmatprep.subr.mxu0 0.0
    %1606 = vmatpush1.msra.mxu0 0.0
    %1607 = vmatprep.subr.mxu0 0.0
    %1608 = vmatpush1.msra.mxu0 0.0
    %1609 = vmatprep.subr.mxu0 0.0
    %1610 = vmatpush1.msra.mxu0 0.0
    %1611 = vmatprep.subr.mxu0 0.0
    %1612 = vmatpush1.msra.mxu0 0.0
    %1613 = vmatprep.subr.mxu0 0.0
    %1614 = vmatpush1.msra.mxu0 0.0
    %1615 = vmatprep.subr.mxu0 0.0
    %1616 = vmatpush1.msra.mxu0 0.0
    %1617 = vmatprep.subr.mxu0 0.0
    %1618 = vmatpush1.msra.mxu0 0.0
    %1619 = vmatprep.subr.mxu0 0.0
    %1620 = vmatpush1.msra.mxu0 0.0
    %1621 = vmatprep.subr.mxu0 0.0
    %1622 = vmatpush1.msra.mxu0 0.0
    %1623 = vmatprep.subr.mxu0 0.0
    %1624 = vmatpush1.msra.mxu0 0.0
    %1625 = vmatprep.subr.mxu0 0.0
    %1626 = vmatpush1.msra.mxu0 0.0
    %1627 = vmatprep.subr.mxu0 0.0
    %1628 = vmatpush1.msra.mxu0 0.0
    %1629 = vmatprep.subr.mxu0 0.0
    %1630 = vmatpush1.msra.mxu0 0.0
    %1631 = vmatprep.subr.mxu0 0.0
    %1632 = vmatpush1.msra.mxu0 0.0
    %1633 = vmatprep.subr.mxu0 0.0
    %1634 = vmatpush1.msra.mxu0 0.0
    %1635 = vmatprep.subr.mxu0 0.0
    %1636 = vmatpush1.msra.mxu0 0.0
    %1637 = vmatprep.subr.mxu0 0.0
    %1638 = vmatpush1.msra.mxu0 0.0
    %1639 = vmatprep.subr.mxu0 0.0
    %1640 = vmatpush1.msra.mxu0 0.0
    %1641 = vmatprep.subr.mxu0 0.0
    %1642 = vmatpush1.msra.mxu0 0.0
    %1643 = vmatprep.subr.mxu0 0.0
    %1644 = vmatpush1.msra.mxu0 0.0
    %1645 = vmatprep.subr.mxu0 0.0
    %1646 = vmatpush1.msra.mxu0 0.0
    %1647 = vmatprep.subr.mxu0 0.0
    %1648 = vmatpush1.msra.mxu0 0.0
    %1649 = vmatprep.subr.mxu0 0.0
    %1650 = vmatpush1.msra.mxu0 0.0
    %1651 = vmatprep.subr.mxu0 0.0
    %1652 = vmatpush1.msra.mxu0 0.0
    %1653 = vmatprep.subr.mxu0 0.0
    %1654 = vmatpush1.msra.mxu0 0.0
    %1655 = vmatprep.subr.mxu0 0.0
    %1656 = vmatpush1.msra.mxu0 0.0
    %1657 = vmatprep.subr.mxu0 0.0
    %1658 = vmatpush1.msra.mxu0 0.0
    %1659 = vmatprep.mubr.f32.mxu0 0.0
    %1660 = vmatmul.mubr.f32.gmra.mrb[0].mxu0 %v1548
    %v1661 = vpop.f32.mrb[0].mxu0
    %v1662 = vadd.f32 0.0, %v1661
    %v1663 = vpop.f32.mrb[0].mxu0
    %1664 = vmatprep.mubr.f32.mxu0 0.0
    %1665 = vmatmul.mubr.f32.gmra.mrb[0].mxu0 %v1551
    %v1666 = vpop.f32.mrb[0].mxu0
    %v1667 = vadd.f32 0.0, %v1666
    %v1668 = vpop.f32.mrb[0].mxu0
    %1669 = vmatprep.mubr.f32.mxu0 0.0
    %1670 = vmatmul.mubr.f32.gmra.mrb[0].mxu0 %v1554
    %v1671 = vpop.f32.mrb[0].mxu0
    %v1672 = vadd.f32 0.0, %v1671
    %v1673 = vpop.f32.mrb[0].mxu0
    %1674 = vmatprep.mubr.f32.mxu0 0.0
    %1675 = vmatmul.mubr.f32.gmra.mrb[0].mxu0 %v1557
    %v1676 = vpop.f32.mrb[0].mxu0
    %v1677 = vadd.f32 0.0, %v1676
    %v1678 = vpop.f32.mrb[0].mxu0
    %1679 = vmatprep.mubr.f32.mxu0 0.0
    %1680 = vmatmul.mubr.f32.gmra.mrb[0].mxu0 %v1560
    %v1681 = vpop.f32.mrb[0].mxu0
    %v1682 = vadd.f32 0.0, %v1681
    %v1683 = vpop.f32.mrb[0].mxu0
    %1684 = vmatprep.mubr.f32.mxu0 0.0
    %1685 = vmatmul.mubr.f32.gmra.mrb[0].mxu0 %v1563
    %v1686 = vpop.f32.mrb[0].mxu0
    %v1687 = vadd.f32 0.0, %v1686
    %v1688 = vpop.f32.mrb[0].mxu0
    %1689 = vmatprep.mubr.f32.mxu0 0.0
    %1690 = vmatmul.mubr.f32.gmra.mrb[0].mxu0 %v1566
    %v1691 = vpop.f32.mrb[0].mxu0
    %v1692 = vadd.f32 0.0, %v1691
    %v1693 = vpop.f32.mrb[0].mxu0
    %1694 = vmatprep.mubr.f32.mxu0 0.0
    %1695 = vmatmul.mubr.f32.gmra.mrb[0].mxu0 %v1569
    %v1696 = vpop.f32.mrb[0].mxu0
    %v1697 = vadd.f32 0.0, %v1696
    %v1698 = vpop.f32.mrb[0].mxu0
    %1699 = vmatprep.mubr.f32.mxu0 0.0
    %1700 = vmatmul.mubr.f32.gmra.mrb[0].mxu0 %v1572
    %v1701 = vpop.f32.mrb[0].mxu0
    %v1702 = vadd.f32 0.0, %v1701
    %v1703 = vpop.f32.mrb[0].mxu0
    %1704 = vmatprep.mubr.f32.mxu0 0.0
    %1705 = vmatmul.mubr.f32.gmra.mrb[0].mxu0 %v1575
    %v1706 = vpop.f32.mrb[0].mxu0
    %v1707 = vadd.f32 0.0, %v1706
    %v1708 = vpop.f32.mrb[0].mxu0
    %1709 = vmatprep.mubr.f32.mxu0 0.0
    %1710 = vmatmul.mubr.f32.gmra.mrb[0].mxu0 %v1578
    %v1711 = vpop.f32.mrb[0].mxu0
    %v1712 = vadd.f32 0.0, %v1711
    %v1713 = vpop.f32.mrb[0].mxu0
    %1714 = vmatprep.mubr.f32.mxu0 0.0
    %1715 = vmatmul.mubr.f32.gmra.mrb[0].mxu0 %v1581
    %v1716 = vpop.f32.mrb[0].mxu0
    %v1717 = vadd.f32 0.0, %v1716
    %v1718 = vpop.f32.mrb[0].mxu0
    %1719 = vmatprep.mubr.f32.mxu0 0.0
    %1720 = vmatmul.mubr.f32.gmra.mrb[0].mxu0 %v1584
    %v1721 = vpop.f32.mrb[0].mxu0
    %v1722 = vadd.f32 0.0, %v1721
    %v1723 = vpop.f32.mrb[0].mxu0
    %1724 = vmatprep.mubr.f32.mxu0 0.0
    %1725 = vmatmul.mubr.f32.gmra.mrb[0].mxu0 %v1587
    %v1726 = vpop.f32.mrb[0].mxu0
    %v1727 = vadd.f32 0.0, %v1726
    %v1728 = vpop.f32.mrb[0].mxu0
    %1729 = vmatprep.mubr.f32.mxu0 0.0
    %1730 = vmatmul.mubr.f32.gmra.mrb[0].mxu0 %v1590
    %v1731 = vpop.f32.mrb[0].mxu0
    %v1732 = vadd.f32 0.0, %v1731
    %v1733 = vpop.f32.mrb[0].mxu0
    %1734 = vmatprep.mubr.f32.mxu0 0.0
    %1735 = vmatmul.mubr.f32.gmra.mrb[0].mxu0 %v1593
    %v1736 = vpop.f32.mrb[0].mxu0
    %v1737 = vadd.f32 0.0, %v1736
    %v1738 = vpop.f32.mrb[0].mxu0
    %1739 = vdwg.mxu0
    %v1740 = vmul.f32 %v1662, %v27
    %v1741 = vmul.f32 %v1667, %v28
    %v1742 = vmul.f32 %v1672, %v29
    %v1743 = vmul.f32 %v1677, %v30
    %v1744 = vmul.f32 %v1682, %v31
    %v1745 = vmul.f32 %v1687, %v32
    %v1746 = vmul.f32 %v1692, %v33
    %v1747 = vmul.f32 %v1697, %v34
    %v1748 = vmul.f32 %v1702, %v35
    %v1749 = vmul.f32 %v1707, %v36
    %v1750 = vmul.f32 %v1712, %v37
    %v1751 = vmul.f32 %v1717, %v38
    %v1752 = vmul.f32 %v1722, %v39
    %v1753 = vmul.f32 %v1727, %v40
    %v1754 = vmul.f32 %v1732, %v41
    %v1755 = vmul.f32 %v1737, %v42
    %v1756 = vadd.f32 %v1740, %v1742
    %v1757 = vadd.f32 %v1741, %v1743
    %v1758 = vadd.f32 %v1744, %v1746
    %v1759 = vadd.f32 %v1745, %v1747
    %v1760 = vadd.f32 %v1748, %v1750
    %v1761 = vadd.f32 %v1749, %v1751
    %v1762 = vadd.f32 %v1752, %v1754
    %v1763 = vadd.f32 %v1753, %v1755
    %v1764 = vadd.f32 %v1756, %v1758
    %v1765 = vadd.f32 %v1757, %v1759
    %v1766 = vadd.f32 %v1760, %v1762
    %v1767 = vadd.f32 %v1761, %v1763
    %v1768 = vadd.f32 %v1764, %v1766
    %v1769 = vadd.f32 %v1765, %v1767
    %v1770 = vlaneseq
    %v1771 = vshrl.u32 %v1770, 7
    %v1772 = vsub.s32 1, %v1771
    %v1773 = vrot.slane %v27, %v1772
    %1775 = vrot.lane.b32.xlu0 %v1773, 64
    %v1776 = vpop.permute.xlu0 %1775
    %v1779 = vsel %vm243, %v1768, 0
    %v1782 = vsel %vm243, %v1769, 0
    %1784 = vmatprep.subr.mxu0 0.0
    %1785 = vmatpush1.msra.mxu0 %v1072
    %1786 = vmatprep.subr.mxu0 0.0
    %1787 = vmatpush1.msra.mxu0 %v1073
    %1788 = vmatprep.subr.mxu0 0.0
    %1789 = vmatpush1.msra.mxu0 %v1074
    %1790 = vmatprep.subr.mxu0 0.0
    %1791 = vmatpush1.msra.mxu0 %v1075
    %1792 = vmatprep.subr.mxu0 0.0
    %1793 = vmatpush1.msra.mxu0 0.0
    %1794 = vmatprep.subr.mxu0 0.0
    %1795 = vmatpush1.msra.mxu0 0.0
    %1796 = vmatprep.subr.mxu0 0.0
    %1797 = vmatpush1.msra.mxu0 0.0
    %1798 = vmatprep.subr.mxu0 0.0
    %1799 = vmatpush1.msra.mxu0 0.0
    %1800 = vmatprep.subr.mxu0 0.0
    %1801 = vmatpush1.msra.mxu0 0.0
    %1802 = vmatprep.subr.mxu0 0.0
    %1803 = vmatpush1.msra.mxu0 0.0
    %1804 = vmatprep.subr.mxu0 0.0
    %1805 = vmatpush1.msra.mxu0 0.0
    %1806 = vmatprep.subr.mxu0 0.0
    %1807 = vmatpush1.msra.mxu0 0.0
    %1808 = vmatprep.subr.mxu0 0.0
    %1809 = vmatpush1.msra.mxu0 0.0
    %1810 = vmatprep.subr.mxu0 0.0
    %1811 = vmatpush1.msra.mxu0 0.0
    %1812 = vmatprep.subr.mxu0 0.0
    %1813 = vmatpush1.msra.mxu0 0.0
    %1814 = vmatprep.subr.mxu0 0.0
    %1815 = vmatpush1.msra.mxu0 0.0
    %1816 = vmatprep.subr.mxu0 0.0
    %1817 = vmatpush1.msra.mxu0 0.0
    %1818 = vmatprep.subr.mxu0 0.0
    %1819 = vmatpush1.msra.mxu0 0.0
    %1820 = vmatprep.subr.mxu0 0.0
    %1821 = vmatpush1.msra.mxu0 0.0
    %1822 = vmatprep.subr.mxu0 0.0
    %1823 = vmatpush1.msra.mxu0 0.0
    %1824 = vmatprep.subr.mxu0 0.0
    %1825 = vmatpush1.msra.mxu0 0.0
    %1826 = vmatprep.subr.mxu0 0.0
    %1827 = vmatpush1.msra.mxu0 0.0
    %1828 = vmatprep.subr.mxu0 0.0
    %1829 = vmatpush1.msra.mxu0 0.0
    %1830 = vmatprep.subr.mxu0 0.0
    %1831 = vmatpush1.msra.mxu0 0.0
    %1832 = vmatprep.subr.mxu0 0.0
    %1833 = vmatpush1.msra.mxu0 0.0
    %1834 = vmatprep.subr.mxu0 0.0
    %1835 = vmatpush1.msra.mxu0 0.0
    %1836 = vmatprep.subr.mxu0 0.0
    %1837 = vmatpush1.msra.mxu0 0.0
    %1838 = vmatprep.subr.mxu0 0.0
    %1839 = vmatpush1.msra.mxu0 0.0
    %1840 = vmatprep.subr.mxu0 0.0
    %1841 = vmatpush1.msra.mxu0 0.0
    %1842 = vmatprep.subr.mxu0 0.0
    %1843 = vmatpush1.msra.mxu0 0.0
    %1844 = vmatprep.subr.mxu0 0.0
    %1845 = vmatpush1.msra.mxu0 0.0
    %1846 = vmatprep.subr.mxu0 0.0
    %1847 = vmatpush1.msra.mxu0 0.0
    %1848 = vmatprep.mubr.f32.mxu0 0.0
    %1849 = vmatmul.mubr.f32.gmra.mrb[0].mxu0 %v1779
    %v1850 = vpop.f32.mrb[0].mxu0
    %v1851 = vadd.f32 %v1776, %v1850
    %v1852 = vpop.f32.mrb[0].mxu0
    %1853 = vmatprep.mubr.f32.mxu0 0.0
    %1854 = vmatmul.mubr.f32.gmra.mrb[0].mxu0 %v1782
    %v1855 = vpop.f32.mrb[0].mxu0
    %v1856 = vadd.f32 %v1776, %v1855
    %v1857 = vpop.f32.mrb[0].mxu0
    %1858 = vdwg.mxu0
    %v1859 = vadd.f32 %v1851, %v983
    %v1860 = vadd.f32 %v1856, %v984
    %v1861 = vsel %vm243, %v1859, 0.0
    %1862 = vadd.xlane.f32.xlu0 %v1861
    %v1863 = vpop.xlane.xlu0 %1862
    %v1864 = vsel %vm243, %v1860, 0.0
    %1865 = vadd.xlane.f32.xlu0 %v1864
    %v1866 = vpop.xlane.xlu0 %1865
    %v1867 = vmul.f32 %v1863, %v944
    %v1868 = vmul.f32 %v1866, %v944
    %v1869 = vsub.f32 %v1859, %v1867
    %v1870 = vsub.f32 %v1860, %v1868
    %v1871 = vmul.f32 %v1869, %v1869
    %v1872 = vmul.f32 %v1870, %v1870
    %v1873 = vsel %vm243, %v1871, 0.0
    %1874 = vadd.xlane.f32.xlu0 %v1873
    %v1875 = vpop.xlane.xlu0 %1874
    %v1876 = vsel %vm243, %v1872, 0.0
    %1877 = vadd.xlane.f32.xlu0 %v1876
    %v1878 = vpop.xlane.xlu0 %1877
    %v1879 = vmul.f32 %v1875, %v944
    %v1880 = vmul.f32 %v1878, %v944
    %v1881 = vadd.f32 %v1879, 1e-05
    %v1882 = vadd.f32 %v1880, 1e-05
    %v1883 = vrsqrt.pop %v1881
    %v1884 = vrsqrt.pop %v1882
    %v1885 = vmul.f32 %v1869, %v1883
    %v1886 = vmul.f32 %v1870, %v1884
    %v1887 = vlaneseq
    %v1888 = vshrl.u32 %v1887, 7
    %v1889 = vsub.s32 4, %v1888
    %v1890 = vrot.slane %v27, %v1889
    %1892 = vrot.lane.b32.xlu0 %v1890, 64
    %v1893 = vpop.permute.xlu0 %1892
    %v1895 = vmul.f32 %v1885, %v1893
    %v1896 = vmul.f32 %v1886, %v1893
    %v1897 = vlaneseq
    %v1898 = vshrl.u32 %v1897, 7
    %v1899 = vsub.s32 5, %v1898
    %v1900 = vrot.slane %v27, %v1899
    %1902 = vrot.lane.b32.xlu0 %v1900, 64
    %v1903 = vpop.permute.xlu0 %1902
    %v1905 = vadd.f32 %v1895, %v1903
    %v1906 = vadd.f32 %v1896, %v1903
    %v1907 = vld [vmem:[%s3] sm:$0xff]
    %v1908 = vld [vmem:[%s3 + $0x8] sm:$0xff]
    %v1909 = vld [vmem:[%s3 + $0x10] sm:$0xff]
    %v1910 = vld [vmem:[%s3 + $0x18] sm:$0xff]
    %v1911 = vld [vmem:[%s4] sm:$0x1]
    %v1913 = vlaneseq
    %v1914 = vshrl.u32 %v1913, 7
    %v1915 = vsub.s32 0, %v1914
    %v1916 = vrot.slane %v1911, %v1915
    %v1919 = vsel %vm243, %v1905, 0
    %v1922 = vsel %vm243, %v1906, 0
    %1924 = vmatprep.subr.mxu0 0.0
    %1925 = vmatpush1.msra.mxu0 %v1907
    %1926 = vmatprep.subr.mxu0 0.0
    %1927 = vmatpush1.msra.mxu0 %v1908
    %1928 = vmatprep.subr.mxu0 0.0
    %1929 = vmatpush1.msra.mxu0 %v1909
    %1930 = vmatprep.subr.mxu0 0.0
    %1931 = vmatpush1.msra.mxu0 %v1910
    %1932 = vmatprep.subr.mxu0 0.0
    %1933 = vmatpush1.msra.mxu0 0.0
    %1934 = vmatprep.subr.mxu0 0.0
    %1935 = vmatpush1.msra.mxu0 0.0
    %1936 = vmatprep.subr.mxu0 0.0
    %1937 = vmatpush1.msra.mxu0 0.0
    %1938 = vmatprep.subr.mxu0 0.0
    %1939 = vmatpush1.msra.mxu0 0.0
    %1940 = vmatprep.subr.mxu0 0.0
    %1941 = vmatpush1.msra.mxu0 0.0
    %1942 = vmatprep.subr.mxu0 0.0
    %1943 = vmatpush1.msra.mxu0 0.0
    %1944 = vmatprep.subr.mxu0 0.0
    %1945 = vmatpush1.msra.mxu0 0.0
    %1946 = vmatprep.subr.mxu0 0.0
    %1947 = vmatpush1.msra.mxu0 0.0
    %1948 = vmatprep.subr.mxu0 0.0
    %1949 = vmatpush1.msra.mxu0 0.0
    %1950 = vmatprep.subr.mxu0 0.0
    %1951 = vmatpush1.msra.mxu0 0.0
    %1952 = vmatprep.subr.mxu0 0.0
    %1953 = vmatpush1.msra.mxu0 0.0
    %1954 = vmatprep.subr.mxu0 0.0
    %1955 = vmatpush1.msra.mxu0 0.0
    %1956 = vmatprep.subr.mxu0 0.0
    %1957 = vmatpush1.msra.mxu0 0.0
    %1958 = vmatprep.subr.mxu0 0.0
    %1959 = vmatpush1.msra.mxu0 0.0
    %1960 = vmatprep.subr.mxu0 0.0
    %1961 = vmatpush1.msra.mxu0 0.0
    %1962 = vmatprep.subr.mxu0 0.0
    %1963 = vmatpush1.msra.mxu0 0.0
    %1964 = vmatprep.subr.mxu0 0.0
    %1965 = vmatpush1.msra.mxu0 0.0
    %1966 = vmatprep.subr.mxu0 0.0
    %1967 = vmatpush1.msra.mxu0 0.0
    %1968 = vmatprep.subr.mxu0 0.0
    %1969 = vmatpush1.msra.mxu0 0.0
    %1970 = vmatprep.subr.mxu0 0.0
    %1971 = vmatpush1.msra.mxu0 0.0
    %1972 = vmatprep.subr.mxu0 0.0
    %1973 = vmatpush1.msra.mxu0 0.0
    %1974 = vmatprep.subr.mxu0 0.0
    %1975 = vmatpush1.msra.mxu0 0.0
    %1976 = vmatprep.subr.mxu0 0.0
    %1977 = vmatpush1.msra.mxu0 0.0
    %1978 = vmatprep.subr.mxu0 0.0
    %1979 = vmatpush1.msra.mxu0 0.0
    %1980 = vmatprep.subr.mxu0 0.0
    %1981 = vmatpush1.msra.mxu0 0.0
    %1982 = vmatprep.subr.mxu0 0.0
    %1983 = vmatpush1.msra.mxu0 0.0
    %1984 = vmatprep.subr.mxu0 0.0
    %1985 = vmatpush1.msra.mxu0 0.0
    %1986 = vmatprep.subr.mxu0 0.0
    %1987 = vmatpush1.msra.mxu0 0.0
    %1988 = vmatprep.mubr.f32.mxu0 0.0
    %1989 = vmatmul.mubr.f32.gmra.mrb[0].mxu0 %v1919
    %v1990 = vpop.f32.mrb[0].mxu0
    %v1991 = vadd.f32 %v1916, %v1990
    %v1992 = vpop.f32.mrb[0].mxu0
    %1993 = vmatprep.mubr.f32.mxu0 0.0
    %1994 = vmatmul.mubr.f32.gmra.mrb[0].mxu0 %v1922
    %v1995 = vpop.f32.mrb[0].mxu0
    %v1996 = vadd.f32 %v1916, %v1995
    %v1997 = vpop.f32.mrb[0].mxu0
    %1998 = vdwg.mxu0
    %v1999 = vmax.f32 %v1991, 0.0
    %v2000 = vmax.f32 %v1996, 0.0
    %v2001 = vld [vmem:[%s5] sm:$0xff]
    %v2002 = vld [vmem:[%s5 + $0x8] sm:$0xff]
    %v2003 = vld [vmem:[%s5 + $0x10] sm:$0xff]
    %v2004 = vld [vmem:[%s5 + $0x18] sm:$0xff]
    %v2005 = vld [vmem:[%s5 + $0x20] sm:$0xff]
    %v2006 = vld [vmem:[%s5 + $0x28] sm:$0xff]
    %v2007 = vld [vmem:[%s5 + $0x30] sm:$0xff]
    %v2008 = vld [vmem:[%s5 + $0x38] sm:$0xff]
    %v2009 = vld [vmem:[%s5 + $0x40] sm:$0xff]
    %v2010 = vld [vmem:[%s5 + $0x48] sm:$0xff]
    %v2011 = vld [vmem:[%s5 + $0x50] sm:$0xff]
    %v2012 = vld [vmem:[%s5 + $0x58] sm:$0xff]
    %v2013 = vld [vmem:[%s5 + $0x60] sm:$0xff]
    %v2014 = vld [vmem:[%s5 + $0x68] sm:$0xff]
    %v2015 = vld [vmem:[%s5 + $0x70] sm:$0xff]
    %v2016 = vld [vmem:[%s5 + $0x78] sm:$0xff]
    %v2017 = vlaneseq
    %v2018 = vshrl.u32 %v2017, 7
    %v2019 = vsub.s32 0, %v2018
    %v2020 = vrot.slane %v28, %v2019
    %2022 = vrot.lane.b32.xlu0 %v2020, 64
    %v2023 = vpop.permute.xlu0 %2022
    %2025 = vmatprep.subr.mxu0 0.0
    %2026 = vmatpush1.msra.mxu0 %v2001
    %2027 = vmatprep.subr.mxu0 0.0
    %2028 = vmatpush1.msra.mxu0 %v2002
    %2029 = vmatprep.subr.mxu0 0.0
    %2030 = vmatpush1.msra.mxu0 %v2003
    %2031 = vmatprep.subr.mxu0 0.0
    %2032 = vmatpush1.msra.mxu0 %v2004
    %2033 = vmatprep.subr.mxu0 0.0
    %2034 = vmatpush1.msra.mxu0 %v2005
    %2035 = vmatprep.subr.mxu0 0.0
    %2036 = vmatpush1.msra.mxu0 %v2006
    %2037 = vmatprep.subr.mxu0 0.0
    %2038 = vmatpush1.msra.mxu0 %v2007
    %2039 = vmatprep.subr.mxu0 0.0
    %2040 = vmatpush1.msra.mxu0 %v2008
    %2041 = vmatprep.subr.mxu0 0.0
    %2042 = vmatpush1.msra.mxu0 %v2009
    %2043 = vmatprep.subr.mxu0 0.0
    %2044 = vmatpush1.msra.mxu0 %v2010
    %2045 = vmatprep.subr.mxu0 0.0
    %2046 = vmatpush1.msra.mxu0 %v2011
    %2047 = vmatprep.subr.mxu0 0.0
    %2048 = vmatpush1.msra.mxu0 %v2012
    %2049 = vmatprep.subr.mxu0 0.0
    %2050 = vmatpush1.msra.mxu0 %v2013
    %2051 = vmatprep.subr.mxu0 0.0
    %2052 = vmatpush1.msra.mxu0 %v2014
    %2053 = vmatprep.subr.mxu0 0.0
    %2054 = vmatpush1.msra.mxu0 %v2015
    %2055 = vmatprep.subr.mxu0 0.0
    %2056 = vmatpush1.msra.mxu0 %v2016
    %2057 = vmatprep.subr.mxu0 0.0
    %2058 = vmatpush1.msra.mxu0 0.0
    %2059 = vmatprep.subr.mxu0 0.0
    %2060 = vmatpush1.msra.mxu0 0.0
    %2061 = vmatprep.subr.mxu0 0.0
    %2062 = vmatpush1.msra.mxu0 0.0
    %2063 = vmatprep.subr.mxu0 0.0
    %2064 = vmatpush1.msra.mxu0 0.0
    %2065 = vmatprep.subr.mxu0 0.0
    %2066 = vmatpush1.msra.mxu0 0.0
    %2067 = vmatprep.subr.mxu0 0.0
    %2068 = vmatpush1.msra.mxu0 0.0
    %2069 = vmatprep.subr.mxu0 0.0
    %2070 = vmatpush1.msra.mxu0 0.0
    %2071 = vmatprep.subr.mxu0 0.0
    %2072 = vmatpush1.msra.mxu0 0.0
    %2073 = vmatprep.subr.mxu0 0.0
    %2074 = vmatpush1.msra.mxu0 0.0
    %2075 = vmatprep.subr.mxu0 0.0
    %2076 = vmatpush1.msra.mxu0 0.0
    %2077 = vmatprep.subr.mxu0 0.0
    %2078 = vmatpush1.msra.mxu0 0.0
    %2079 = vmatprep.subr.mxu0 0.0
    %2080 = vmatpush1.msra.mxu0 0.0
    %2081 = vmatprep.subr.mxu0 0.0
    %2082 = vmatpush1.msra.mxu0 0.0
    %2083 = vmatprep.subr.mxu0 0.0
    %2084 = vmatpush1.msra.mxu0 0.0
    %2085 = vmatprep.subr.mxu0 0.0
    %2086 = vmatpush1.msra.mxu0 0.0
    %2087 = vmatprep.subr.mxu0 0.0
    %2088 = vmatpush1.msra.mxu0 0.0
    %2089 = vmatprep.mubr.f32.mxu0 0.0
    %2090 = vmatmul.mubr.f32.gmra.mrb[0].mxu0 %v1999
    %v2091 = vpop.f32.mrb[0].mxu0
    %v2092 = vadd.f32 %v2023, %v2091
    %v2093 = vpop.f32.mrb[0].mxu0
    %2094 = vmatprep.mubr.f32.mxu0 0.0
    %2095 = vmatmul.mubr.f32.gmra.mrb[0].mxu0 %v2000
    %v2096 = vpop.f32.mrb[0].mxu0
    %v2097 = vadd.f32 %v2023, %v2096
    %v2098 = vpop.f32.mrb[0].mxu0
    %2099 = vdwg.mxu0
    %v2100 = vadd.f32 %v2092, %v1905
    %v2101 = vadd.f32 %v2097, %v1906
    %v2102 = vsel %vm243, %v2100, 0.0
    %2103 = vadd.xlane.f32.xlu0 %v2102
    %v2104 = vpop.xlane.xlu0 %2103
    %v2105 = vsel %vm243, %v2101, 0.0
    %2106 = vadd.xlane.f32.xlu0 %v2105
    %v2107 = vpop.xlane.xlu0 %2106
    %v2108 = vmul.f32 %v2104, %v944
    %v2109 = vmul.f32 %v2107, %v944
    %v2110 = vsub.f32 %v2100, %v2108
    %v2111 = vsub.f32 %v2101, %v2109
    %v2112 = vmul.f32 %v2110, %v2110
    %v2113 = vmul.f32 %v2111, %v2111
    %v2114 = vsel %vm243, %v2112, 0.0
    %2115 = vadd.xlane.f32.xlu0 %v2114
    %v2116 = vpop.xlane.xlu0 %2115
    %v2117 = vsel %vm243, %v2113, 0.0
    %2118 = vadd.xlane.f32.xlu0 %v2117
    %v2119 = vpop.xlane.xlu0 %2118
    %v2120 = vmul.f32 %v2116, %v944
    %v2121 = vmul.f32 %v2119, %v944
    %v2122 = vadd.f32 %v2120, 1e-05
    %v2123 = vadd.f32 %v2121, 1e-05
    %v2124 = vrsqrt.pop %v2122
    %v2125 = vrsqrt.pop %v2123
    %v2126 = vmul.f32 %v2110, %v2124
    %v2127 = vmul.f32 %v2111, %v2125
    %v2128 = vlaneseq
    %v2129 = vshrl.u32 %v2128, 7
    %v2130 = vsub.s32 6, %v2129
    %v2131 = vrot.slane %v27, %v2130
    %2133 = vrot.lane.b32.xlu0 %v2131, 64
    %v2134 = vpop.permute.xlu0 %2133
    %v2136 = vmul.f32 %v2126, %v2134
    %v2137 = vmul.f32 %v2127, %v2134
    %v2138 = vlaneseq
    %v2139 = vshrl.u32 %v2138, 7
    %v2140 = vsub.s32 7, %v2139
    %v2141 = vrot.slane %v27, %v2140
    %2143 = vrot.lane.b32.xlu0 %v2141, 64
    %v2144 = vpop.permute.xlu0 %2143
    %v2146 = vadd.f32 %v2136, %v2144
    %v2147 = vadd.f32 %v2137, %v2144
    %2148 = vst.msk [vmem:[#allocation2] sm:$0xff] %vm243, %v2146
    %2149 = vst.msk [vmem:[#allocation2 + $0x8] sm:$0xff] %vm243, %v2147
    // Predicated region
    $region30: #{tpu_custom_call.1} parent=1 // pred_check
      _
    $region31: #{tpu_custom_call.1} parent=1 // pred_check_branch
      %2151 = sbr.rel (0) target = $region33
    $region32: #{tpu_custom_call.1} parent=1 // pred_region
      %s2153 = ssub.s32 256, 256
      %2154 = vsyncadd [#allocation3], %s2153
      %s2155 = sshll.u32 [#allocation2], 4
      %s2156 = int_to_ptr.vmem [resolvable:$true] %s2155
      %2161 = dma.vmem_to_hbm [thread:$0]  %s2156, 256, %s7, [#allocation3], 128, 128, 8
    $region33: #{tpu_custom_call.1} parent=1 // pred_fallthru
      _
    // Predicated region
    $region34: #{tpu_custom_call.1} parent=1 // pred_check
      _
    $region35: #{tpu_custom_call.1} parent=1 // pred_check_branch
      %2163 = sbr.rel (0) target = $region37
    $region36: #{tpu_custom_call.1} parent=1 // pred_region
      %2164 = dma.done [#allocation3], 256
    $region37: #{tpu_custom_call.1} parent=1 // pred_fallthru
      _
    %2165 = vsyncpa [#allocation3], 1

</llo_original>
